<compile_context>
chip_gen: v5e
topology: v5e:2x2
jax: 0.10.0
libtpu: 0.0.40
codegen_flags: <defaults>
</compile_context>

<pallas_src>
import jax
import jax.numpy as jnp
from jax.experimental import pallas as pl
from jax.experimental.pallas import tpu as pltpu


def _corner_loss_kernel(tl_heat_ref, br_heat_ref, tl_tag_ref, br_tag_ref,
                        tl_regr_ref, br_regr_ref, mask_ref, out_ref):
    """One batch tile; emits 4 partial sums into row 0 of an (8,128) slab.

    lanes: 0 = focal partial, 1 = masked smooth-L1 sum (tl+br),
           2 = mask sum, 3 = pull+push partial.
    """
    eps = 1e-4
    heat_tl = jnp.clip(jax.nn.sigmoid(tl_heat_ref[...]), eps, 1.0 - eps)
    heat_br = jnp.clip(jax.nn.sigmoid(br_heat_ref[...]), eps, 1.0 - eps)
    tag_tl = tl_tag_ref[...]
    tag_br = br_tag_ref[...]
    regr_tl = tl_regr_ref[...]
    regr_br = br_regr_ref[...]
    msk = mask_ref[...]

    def focal_partial(pred, tgt):
        pos = (tgt == 1.0).astype(jnp.float32)
        # Keep the strict `< 1` test (not 1 - pos) so targets > 1 behave
        # exactly like the PyTorch reference; one O(TB*N) compare is noise
        # next to the O(TB*N^2) push path.
        neg = (tgt < 1.0).astype(jnp.float32)
        num_pos = jnp.sum(pos, axis=1, keepdims=True)                   # (TB,1)
        pos_loss = jnp.sum(pos * jnp.log(pred) * (1.0 - pred) ** 2,
                           axis=1, keepdims=True)
        neg_f = jnp.sum(neg * jnp.log(1.0 - pred) * pred * pred,
                        axis=1, keepdims=True)
        # neg_weights summed over ALL positions (PyTorch broadcast artifact).
        w = jnp.sum((1.0 - tgt) ** 4, axis=1, keepdims=True)
        neg_loss = neg_f * w
        denom = jnp.where(num_pos == 0.0, 1.0, num_pos)
        per_b = jnp.where(num_pos == 0.0, -neg_loss,
                          -(pos_loss + neg_loss) / denom)
        return jnp.sum(per_b)

    def sl1_partial(out, tgt):
        diff = out - tgt
        ad = jnp.abs(diff)
        sl1 = jnp.where(ad < 1.0, 0.5 * diff * diff, ad - 0.5)
        return jnp.sum(sl1 * msk)

    # ---- pull / push (associative embedding) partials ----------------------
    n_b = jnp.sum(msk, axis=1, keepdims=True)                           # (TB,1)

    # pull: (t0-tm)^2 + (t1-tm)^2 == 0.5*(t0-t1)^2; per-batch divide hoisted
    # onto the (TB,1) reduction.
    dt = tag_tl - tag_br
    pull_b = (jnp.sum(msk * (0.5 * dt * dt), axis=1, keepdims=True)
              / (n_b + 1e-4))                                           # (TB,1)

    # push: masked full pairwise sum, then subtract the diagonal analytically
    # (each masked diagonal term is relu(1-0)=1, i.e. the diagonal sums to
    # n_b), so no (TB,N,N) iota / eye / pair-select is materialized.  The
    # 1/((n_b-1)*n_b + 1e-4) divide also acts on (TB,1), not on (TB,N,N).
    tm = (tag_tl + tag_br) * 0.5                                        # (TB,N)
    d = jnp.maximum(1.0 - jnp.abs(tm[:, :, None] - tm[:, None, :]), 0.0)
    row = jnp.sum(d * msk[:, None, :], axis=2)                          # (TB,N)
    pair_sum = jnp.sum(row * msk, axis=1, keepdims=True)                # (TB,1)
    num2 = (n_b - 1.0) * n_b
    push_b = (pair_sum - n_b) / (num2 + 1e-4)

    focal_p = focal_partial(heat_tl, tag_tl) + focal_partial(heat_br, tag_br)
    sl1_p = sl1_partial(regr_tl, tag_tl) + sl1_partial(regr_br, tag_br)
    msum_p = jnp.sum(msk)
    pp_p = jnp.sum(pull_b) + jnp.sum(push_b)

    # Lane-padded (1,8,128) output slab: partials in row 0, lanes 0..3.
    sub = jax.lax.broadcasted_iota(jnp.int32, (1, 8, 128), 1)
    lane = jax.lax.broadcasted_iota(jnp.int32, (1, 8, 128), 2)
    first = sub == 0
    out_ref[...] = (jnp.where(first & (lane == 0), focal_p, 0.0)
                    + jnp.where(first & (lane == 1), sl1_p, 0.0)
                    + jnp.where(first & (lane == 2), msum_p, 0.0)
                    + jnp.where(first & (lane == 3), pp_p, 0.0))


def _pick_tb(batch, n, max_tb=8):
    """Batch-tile size: ~2 live (TB,N,N) f32 temps within ~8 MiB (safe under
    the default scoped-VMEM limit on v5e/v6e/v7x), a multiple of 8 sublanes
    (or the full batch) that divides the batch."""
    budget = 8 * 1024 * 1024
    cap = max(1, budget // max(1, 2 * n * n * 4))
    cap = min(cap, max_tb, batch)
    for tb in range(cap, 0, -1):
        if batch % tb == 0 and (tb % 8 == 0 or tb == batch):
            return tb
    return batch


def corner_loss(tl_heats, br_heats, tl_tags, br_tags, tl_regrs, br_regrs, mask,
                *, theta=1.0, alpha=2.0, beta=4.0, max_block_b=8):
    # theta is stored by the PyTorch module but never used in forward().
    del theta

    def prep(x):
        # (B,N,1)->(B,N): trailing-unit squeeze is a metadata-only reshape in
        # XLA (bitcast, no HBM round-trip); same-dtype astype is elided.
        if x.ndim == 3:
            x = jnp.squeeze(x, axis=-1)
        return x if x.dtype == jnp.float32 else x.astype(jnp.float32)

    tl_heats, br_heats, tl_tags, br_tags, tl_regrs, br_regrs = (
        prep(tl_heats), prep(br_heats), prep(tl_tags), prep(br_tags),
        prep(tl_regrs), prep(br_regrs))
    msk = prep(mask)

    B, N = tl_tags.shape
    if B != N:
        # pp_loss's eye(batch) broadcast only type-checks when B == N.
        raise ValueError(f"CornerLoss pp_loss requires batch == num_objects "
                         f"(got B={B}, N={N})")

    tb = _pick_tb(B, N, max_block_b)
    nb = B // tb

    in_spec = pl.BlockSpec((tb, N), lambda i: (i, 0))
    partials = pl.pallas_call(
        _corner_loss_kernel,
        out_shape=jax.ShapeDtypeStruct((nb, 8, 128), jnp.float32),
        grid_spec=pltpu.PrefetchScalarGridSpec(
            num_scalar_prefetch=0,
            grid=(nb,),
            in_specs=[in_spec] * 7,
            out_specs=pl.BlockSpec((1, 8, 128), lambda i: (i, 0, 0)),
        ),
        compiler_params=pltpu.CompilerParams(
            dimension_semantics=("parallel",)),
    )(tl_heats, br_heats, tl_tags, br_tags, tl_regrs, br_regrs, msk)

    # Tiny final combine (O(nb) work) in the wrapper; this is where the
    # global regr denominator num = sum(mask) * 2 is applied.
    focal_l = jnp.sum(partials[:, 0, 0])
    sl1_sum = jnp.sum(partials[:, 0, 1])
    mask_sum = jnp.sum(partials[:, 0, 2])
    pp_l = jnp.sum(partials[:, 0, 3])
    regr_l = sl1_sum / (2.0 * mask_sum + 1e-6)
    return focal_l + alpha * regr_l + beta * pp_l


if __name__ == "__main__":
    # B must equal N for the original pp_loss eye() broadcast to be valid.
    # NOTE: at these tiny demo sizes the kernel is call-overhead / lane-bound;
    # the tiling + partial-sum structure pays off at N >= 128.
    B = N = 16
    key = jax.random.PRNGKey(0)
    ks = jax.random.split(key, 9)

    # "heat" logits (sigmoid + clamp applied inside the kernel)
    tl_heats = jax.random.normal(ks[0], (B, N, 1), jnp.float32)
    br_heats = jax.random.normal(ks[1], (B, N, 1), jnp.float32)

    # tags in [0, 0.9) with some exact 1.0 entries (positive corner locations)
    base_tl = jax.random.uniform(ks[2], (B, N, 1), jnp.float32, 0.0, 0.9)
    base_br = jax.random.uniform(ks[3], (B, N, 1), jnp.float32, 0.0, 0.9)
    pos_tl = jax.random.bernoulli(ks[4], 0.3, (B, N, 1))
    pos_br = jax.random.bernoulli(ks[5], 0.3, (B, N, 1))
    tl_tags = jnp.where(pos_tl, 1.0, base_tl).astype(jnp.float32)
    br_tags = jnp.where(pos_br, 1.0, base_br).astype(jnp.float32)

    tl_regrs = jax.random.normal(ks[6], (B, N, 1), jnp.float32)
    br_regrs = jax.random.normal(ks[7], (B, N, 1), jnp.float32)

    mask = jax.random.bernoulli(ks[8], 0.7, (B, N)).astype(jnp.float32)

    loss = corner_loss(tl_heats, br_heats, tl_tags, br_tags,
                       tl_regrs, br_regrs, mask,
                       theta=1.0, alpha=2.0, beta=4.0)
    jax.block_until_ready(loss)
    print("KERNEL_OK")
</pallas_src>

<mosaic_0001>
module attributes {stable_mosaic.version = 11 : i64} {
  func.func @_corner_loss_kernel(%arg0: i32, %arg1: memref<8x16xf32, #tpu.memory_space<vmem>>, %arg2: memref<8x16xf32, #tpu.memory_space<vmem>>, %arg3: memref<8x16xf32, #tpu.memory_space<vmem>>, %arg4: memref<8x16xf32, #tpu.memory_space<vmem>>, %arg5: memref<8x16xf32, #tpu.memory_space<vmem>>, %arg6: memref<8x16xf32, #tpu.memory_space<vmem>>, %arg7: memref<8x16xf32, #tpu.memory_space<vmem>>, %arg8: memref<1x8x128xf32, #tpu.memory_space<vmem>>) attributes {dimension_semantics = [#tpu.dimension_semantics<parallel>], iteration_bounds = array<i64: 2>, scalar_prefetch = 0 : i64, scratch_operands = 0 : i64, tpu.core_type = #tpu.core_type<tc>, window_params = [{transform_indices = @transform_0, window_bounds = array<i64: 8, 16>}, {transform_indices = @transform_1, window_bounds = array<i64: 8, 16>}, {transform_indices = @transform_2, window_bounds = array<i64: 8, 16>}, {transform_indices = @transform_3, window_bounds = array<i64: 8, 16>}, {transform_indices = @transform_4, window_bounds = array<i64: 8, 16>}, {transform_indices = @transform_5, window_bounds = array<i64: 8, 16>}, {transform_indices = @transform_6, window_bounds = array<i64: 8, 16>}, {transform_indices = @transform_7, window_bounds = array<i64: 1, 8, 128>}]} {
    %c0 = arith.constant 0 : index
    %c0_0 = arith.constant 0 : index
    %0 = vector.load %arg1[%c0, %c0_0] : memref<8x16xf32, #tpu.memory_space<vmem>>, vector<8x16xf32>
    %1 = arith.negf %0 : vector<8x16xf32>
    %2 = math.exp %1 : vector<8x16xf32>
    %cst = arith.constant 1.000000e+00 : f32
    %3 = vector.broadcast %cst : f32 to vector<8x16xf32>
    %4 = arith.addf %3, %2 : vector<8x16xf32>
    %5 = arith.divf %3, %4 : vector<8x16xf32>
    %cst_1 = arith.constant 9.99999974E-5 : f32
    %cst_2 = arith.constant 0.999899983 : f32
    %6 = vector.broadcast %cst_1 : f32 to vector<8x16xf32>
    %7 = arith.maximumf %6, %5 : vector<8x16xf32>
    %8 = vector.broadcast %cst_2 : f32 to vector<8x16xf32>
    %9 = arith.minimumf %8, %7 : vector<8x16xf32>
    %c0_3 = arith.constant 0 : index
    %c0_4 = arith.constant 0 : index
    %10 = vector.load %arg2[%c0_3, %c0_4] : memref<8x16xf32, #tpu.memory_space<vmem>>, vector<8x16xf32>
    %11 = arith.negf %10 : vector<8x16xf32>
    %12 = math.exp %11 : vector<8x16xf32>
    %cst_5 = arith.constant 1.000000e+00 : f32
    %13 = vector.broadcast %cst_5 : f32 to vector<8x16xf32>
    %14 = arith.addf %13, %12 : vector<8x16xf32>
    %15 = arith.divf %13, %14 : vector<8x16xf32>
    %cst_6 = arith.constant 9.99999974E-5 : f32
    %cst_7 = arith.constant 0.999899983 : f32
    %16 = vector.broadcast %cst_6 : f32 to vector<8x16xf32>
    %17 = arith.maximumf %16, %15 : vector<8x16xf32>
    %18 = vector.broadcast %cst_7 : f32 to vector<8x16xf32>
    %19 = arith.minimumf %18, %17 : vector<8x16xf32>
    %c0_8 = arith.constant 0 : index
    %c0_9 = arith.constant 0 : index
    %20 = vector.load %arg3[%c0_8, %c0_9] : memref<8x16xf32, #tpu.memory_space<vmem>>, vector<8x16xf32>
    %c0_10 = arith.constant 0 : index
    %c0_11 = arith.constant 0 : index
    %21 = vector.load %arg4[%c0_10, %c0_11] : memref<8x16xf32, #tpu.memory_space<vmem>>, vector<8x16xf32>
    %c0_12 = arith.constant 0 : index
    %c0_13 = arith.constant 0 : index
    %22 = vector.load %arg5[%c0_12, %c0_13] : memref<8x16xf32, #tpu.memory_space<vmem>>, vector<8x16xf32>
    %c0_14 = arith.constant 0 : index
    %c0_15 = arith.constant 0 : index
    %23 = vector.load %arg6[%c0_14, %c0_15] : memref<8x16xf32, #tpu.memory_space<vmem>>, vector<8x16xf32>
    %c0_16 = arith.constant 0 : index
    %c0_17 = arith.constant 0 : index
    %24 = vector.load %arg7[%c0_16, %c0_17] : memref<8x16xf32, #tpu.memory_space<vmem>>, vector<8x16xf32>
    %cst_18 = arith.constant dense<0.000000e+00> : vector<8xf32>
    %25 = vector.multi_reduction <add>, %24, %cst_18 [1] : vector<8x16xf32> to vector<8xf32>
    %26 = vector.shape_cast %25 : vector<8xf32> to vector<8x1xf32>
    %27 = arith.subf %20, %21 : vector<8x16xf32>
    %cst_19 = arith.constant 5.000000e-01 : f32
    %28 = vector.broadcast %cst_19 : f32 to vector<8x16xf32>
    %29 = arith.mulf %28, %27 : vector<8x16xf32>
    %30 = arith.mulf %29, %27 : vector<8x16xf32>
    %31 = arith.mulf %24, %30 : vector<8x16xf32>
    %cst_20 = arith.constant dense<0.000000e+00> : vector<8xf32>
    %32 = vector.multi_reduction <add>, %31, %cst_20 [1] : vector<8x16xf32> to vector<8xf32>
    %33 = vector.shape_cast %32 : vector<8xf32> to vector<8x1xf32>
    %cst_21 = arith.constant 9.99999974E-5 : f32
    %34 = vector.broadcast %cst_21 : f32 to vector<8x1xf32>
    %35 = arith.addf %26, %34 : vector<8x1xf32>
    %36 = arith.divf %33, %35 : vector<8x1xf32>
    %37 = arith.addf %20, %21 : vector<8x16xf32>
    %cst_22 = arith.constant 5.000000e-01 : f32
    %38 = vector.broadcast %cst_22 : f32 to vector<8x16xf32>
    %39 = arith.mulf %37, %38 : vector<8x16xf32>
    %40 = vector.shape_cast %39 : vector<8x16xf32> to vector<8x16x1xf32>
    %41 = vector.shape_cast %39 : vector<8x16xf32> to vector<8x1x16xf32>
    %42 = vector.broadcast %40 : vector<8x16x1xf32> to vector<8x16x16xf32>
    %43 = vector.broadcast %41 : vector<8x1x16xf32> to vector<8x16x16xf32>
    %44 = arith.subf %42, %43 : vector<8x16x16xf32>
    %45 = math.absf %44 : vector<8x16x16xf32>
    %cst_23 = arith.constant 1.000000e+00 : f32
    %46 = vector.broadcast %cst_23 : f32 to vector<8x16x16xf32>
    %47 = arith.subf %46, %45 : vector<8x16x16xf32>
    %cst_24 = arith.constant 0.000000e+00 : f32
    %48 = vector.broadcast %cst_24 : f32 to vector<8x16x16xf32>
    %49 = arith.maximumf %47, %48 : vector<8x16x16xf32>
    %50 = vector.shape_cast %24 : vector<8x16xf32> to vector<8x1x16xf32>
    %51 = vector.broadcast %50 : vector<8x1x16xf32> to vector<8x16x16xf32>
    %52 = arith.mulf %49, %51 : vector<8x16x16xf32>
    %cst_25 = arith.constant dense<0.000000e+00> : vector<8x16xf32>
    %53 = vector.multi_reduction <add>, %52, %cst_25 [2] : vector<8x16x16xf32> to vector<8x16xf32>
    %54 = arith.mulf %53, %24 : vector<8x16xf32>
    %cst_26 = arith.constant dense<0.000000e+00> : vector<8xf32>
    %55 = vector.multi_reduction <add>, %54, %cst_26 [1] : vector<8x16xf32> to vector<8xf32>
    %56 = vector.shape_cast %55 : vector<8xf32> to vector<8x1xf32>
    %cst_27 = arith.constant 1.000000e+00 : f32
    %57 = vector.broadcast %cst_27 : f32 to vector<8x1xf32>
    %58 = arith.subf %26, %57 : vector<8x1xf32>
    %59 = arith.mulf %58, %26 : vector<8x1xf32>
    %60 = arith.subf %56, %26 : vector<8x1xf32>
    %cst_28 = arith.constant 9.99999974E-5 : f32
    %61 = vector.broadcast %cst_28 : f32 to vector<8x1xf32>
    %62 = arith.addf %59, %61 : vector<8x1xf32>
    %63 = arith.divf %60, %62 : vector<8x1xf32>
    %cst_29 = arith.constant 1.000000e+00 : f32
    %64 = vector.broadcast %cst_29 : f32 to vector<8x16xf32>
    %65 = arith.cmpf oeq, %20, %64 : vector<8x16xf32>
    %66 = arith.extui %65 : vector<8x16xi1> to vector<8x16xi32>
    %67 = arith.sitofp %66 : vector<8x16xi32> to vector<8x16xf32>
    %cst_30 = arith.constant 1.000000e+00 : f32
    %68 = vector.broadcast %cst_30 : f32 to vector<8x16xf32>
    %69 = arith.cmpf olt, %20, %68 : vector<8x16xf32>
    %70 = arith.extui %69 : vector<8x16xi1> to vector<8x16xi32>
    %71 = arith.sitofp %70 : vector<8x16xi32> to vector<8x16xf32>
    %cst_31 = arith.constant dense<0.000000e+00> : vector<8xf32>
    %72 = vector.multi_reduction <add>, %67, %cst_31 [1] : vector<8x16xf32> to vector<8xf32>
    %73 = vector.shape_cast %72 : vector<8xf32> to vector<8x1xf32>
    %74 = math.log %9 : vector<8x16xf32>
    %75 = arith.mulf %67, %74 : vector<8x16xf32>
    %cst_32 = arith.constant 1.000000e+00 : f32
    %76 = vector.broadcast %cst_32 : f32 to vector<8x16xf32>
    %77 = arith.subf %76, %9 : vector<8x16xf32>
    %78 = arith.mulf %77, %77 : vector<8x16xf32>
    %79 = arith.mulf %75, %78 : vector<8x16xf32>
    %cst_33 = arith.constant dense<0.000000e+00> : vector<8xf32>
    %80 = vector.multi_reduction <add>, %79, %cst_33 [1] : vector<8x16xf32> to vector<8xf32>
    %81 = vector.shape_cast %80 : vector<8xf32> to vector<8x1xf32>
    %cst_34 = arith.constant 1.000000e+00 : f32
    %82 = vector.broadcast %cst_34 : f32 to vector<8x16xf32>
    %83 = arith.subf %82, %9 : vector<8x16xf32>
    %84 = math.log %83 : vector<8x16xf32>
    %85 = arith.mulf %71, %84 : vector<8x16xf32>
    %86 = arith.mulf %85, %9 : vector<8x16xf32>
    %87 = arith.mulf %86, %9 : vector<8x16xf32>
    %cst_35 = arith.constant dense<0.000000e+00> : vector<8xf32>
    %88 = vector.multi_reduction <add>, %87, %cst_35 [1] : vector<8x16xf32> to vector<8xf32>
    %89 = vector.shape_cast %88 : vector<8xf32> to vector<8x1xf32>
    %cst_36 = arith.constant 1.000000e+00 : f32
    %90 = vector.broadcast %cst_36 : f32 to vector<8x16xf32>
    %91 = arith.subf %90, %20 : vector<8x16xf32>
    %92 = arith.mulf %91, %91 : vector<8x16xf32>
    %93 = arith.mulf %92, %92 : vector<8x16xf32>
    %cst_37 = arith.constant dense<0.000000e+00> : vector<8xf32>
    %94 = vector.multi_reduction <add>, %93, %cst_37 [1] : vector<8x16xf32> to vector<8xf32>
    %95 = vector.shape_cast %94 : vector<8xf32> to vector<8x1xf32>
    %96 = arith.mulf %89, %95 : vector<8x1xf32>
    %cst_38 = arith.constant 0.000000e+00 : f32
    %97 = vector.broadcast %cst_38 : f32 to vector<8x1xf32>
    %98 = arith.cmpf oeq, %73, %97 : vector<8x1xf32>
    %cst_39 = arith.constant 1.000000e+00 : f32
    %99 = vector.broadcast %cst_39 : f32 to vector<8x1xf32>
    %100 = arith.select %98, %99, %73 : vector<8x1xi1>, vector<8x1xf32>
    %cst_40 = arith.constant 0.000000e+00 : f32
    %101 = vector.broadcast %cst_40 : f32 to vector<8x1xf32>
    %102 = arith.cmpf oeq, %73, %101 : vector<8x1xf32>
    %cst_41 = arith.constant 0.000000e+00 : f32
    %103 = vector.broadcast %cst_41 : f32 to vector<8x1xf32>
    %104 = arith.subf %103, %96 : vector<8x1xf32>
    %105 = arith.addf %81, %96 : vector<8x1xf32>
    %cst_42 = arith.constant 0.000000e+00 : f32
    %106 = vector.broadcast %cst_42 : f32 to vector<8x1xf32>
    %107 = arith.subf %106, %105 : vector<8x1xf32>
    %108 = arith.divf %107, %100 : vector<8x1xf32>
    %109 = arith.select %102, %104, %108 : vector<8x1xi1>, vector<8x1xf32>
    %110 = vector.shape_cast %109 : vector<8x1xf32> to vector<1x8x1xf32>
    %cst_43 = arith.constant dense<0.000000e+00> : vector<1xf32>
    %111 = vector.multi_reduction <add>, %110, %cst_43 [1, 2] : vector<1x8x1xf32> to vector<1xf32>
    %112 = vector.shape_cast %111 : vector<1xf32> to vector<1x1x1xf32>
    %113 = vector.extract %112[0, 0, 0] : f32 from vector<1x1x1xf32>
    %cst_44 = arith.constant 1.000000e+00 : f32
    %114 = vector.broadcast %cst_44 : f32 to vector<8x16xf32>
    %115 = arith.cmpf oeq, %21, %114 : vector<8x16xf32>
    %116 = arith.extui %115 : vector<8x16xi1> to vector<8x16xi32>
    %117 = arith.sitofp %116 : vector<8x16xi32> to vector<8x16xf32>
    %cst_45 = arith.constant 1.000000e+00 : f32
    %118 = vector.broadcast %cst_45 : f32 to vector<8x16xf32>
    %119 = arith.cmpf olt, %21, %118 : vector<8x16xf32>
    %120 = arith.extui %119 : vector<8x16xi1> to vector<8x16xi32>
    %121 = arith.sitofp %120 : vector<8x16xi32> to vector<8x16xf32>
    %cst_46 = arith.constant dense<0.000000e+00> : vector<8xf32>
    %122 = vector.multi_reduction <add>, %117, %cst_46 [1] : vector<8x16xf32> to vector<8xf32>
    %123 = vector.shape_cast %122 : vector<8xf32> to vector<8x1xf32>
    %124 = math.log %19 : vector<8x16xf32>
    %125 = arith.mulf %117, %124 : vector<8x16xf32>
    %cst_47 = arith.constant 1.000000e+00 : f32
    %126 = vector.broadcast %cst_47 : f32 to vector<8x16xf32>
    %127 = arith.subf %126, %19 : vector<8x16xf32>
    %128 = arith.mulf %127, %127 : vector<8x16xf32>
    %129 = arith.mulf %125, %128 : vector<8x16xf32>
    %cst_48 = arith.constant dense<0.000000e+00> : vector<8xf32>
    %130 = vector.multi_reduction <add>, %129, %cst_48 [1] : vector<8x16xf32> to vector<8xf32>
    %131 = vector.shape_cast %130 : vector<8xf32> to vector<8x1xf32>
    %cst_49 = arith.constant 1.000000e+00 : f32
    %132 = vector.broadcast %cst_49 : f32 to vector<8x16xf32>
    %133 = arith.subf %132, %19 : vector<8x16xf32>
    %134 = math.log %133 : vector<8x16xf32>
    %135 = arith.mulf %121, %134 : vector<8x16xf32>
    %136 = arith.mulf %135, %19 : vector<8x16xf32>
    %137 = arith.mulf %136, %19 : vector<8x16xf32>
    %cst_50 = arith.constant dense<0.000000e+00> : vector<8xf32>
    %138 = vector.multi_reduction <add>, %137, %cst_50 [1] : vector<8x16xf32> to vector<8xf32>
    %139 = vector.shape_cast %138 : vector<8xf32> to vector<8x1xf32>
    %cst_51 = arith.constant 1.000000e+00 : f32
    %140 = vector.broadcast %cst_51 : f32 to vector<8x16xf32>
    %141 = arith.subf %140, %21 : vector<8x16xf32>
    %142 = arith.mulf %141, %141 : vector<8x16xf32>
    %143 = arith.mulf %142, %142 : vector<8x16xf32>
    %cst_52 = arith.constant dense<0.000000e+00> : vector<8xf32>
    %144 = vector.multi_reduction <add>, %143, %cst_52 [1] : vector<8x16xf32> to vector<8xf32>
    %145 = vector.shape_cast %144 : vector<8xf32> to vector<8x1xf32>
    %146 = arith.mulf %139, %145 : vector<8x1xf32>
    %cst_53 = arith.constant 0.000000e+00 : f32
    %147 = vector.broadcast %cst_53 : f32 to vector<8x1xf32>
    %148 = arith.cmpf oeq, %123, %147 : vector<8x1xf32>
    %cst_54 = arith.constant 1.000000e+00 : f32
    %149 = vector.broadcast %cst_54 : f32 to vector<8x1xf32>
    %150 = arith.select %148, %149, %123 : vector<8x1xi1>, vector<8x1xf32>
    %cst_55 = arith.constant 0.000000e+00 : f32
    %151 = vector.broadcast %cst_55 : f32 to vector<8x1xf32>
    %152 = arith.cmpf oeq, %123, %151 : vector<8x1xf32>
    %cst_56 = arith.constant 0.000000e+00 : f32
    %153 = vector.broadcast %cst_56 : f32 to vector<8x1xf32>
    %154 = arith.subf %153, %146 : vector<8x1xf32>
    %155 = arith.addf %131, %146 : vector<8x1xf32>
    %cst_57 = arith.constant 0.000000e+00 : f32
    %156 = vector.broadcast %cst_57 : f32 to vector<8x1xf32>
    %157 = arith.subf %156, %155 : vector<8x1xf32>
    %158 = arith.divf %157, %150 : vector<8x1xf32>
    %159 = arith.select %152, %154, %158 : vector<8x1xi1>, vector<8x1xf32>
    %160 = vector.shape_cast %159 : vector<8x1xf32> to vector<1x8x1xf32>
    %cst_58 = arith.constant dense<0.000000e+00> : vector<1xf32>
    %161 = vector.multi_reduction <add>, %160, %cst_58 [1, 2] : vector<1x8x1xf32> to vector<1xf32>
    %162 = vector.shape_cast %161 : vector<1xf32> to vector<1x1x1xf32>
    %163 = vector.extract %162[0, 0, 0] : f32 from vector<1x1x1xf32>
    %164 = arith.addf %113, %163 : f32
    %165 = arith.subf %22, %20 : vector<8x16xf32>
    %166 = math.absf %165 : vector<8x16xf32>
    %cst_59 = arith.constant 1.000000e+00 : f32
    %167 = vector.broadcast %cst_59 : f32 to vector<8x16xf32>
    %168 = arith.cmpf olt, %166, %167 : vector<8x16xf32>
    %cst_60 = arith.constant 5.000000e-01 : f32
    %169 = vector.broadcast %cst_60 : f32 to vector<8x16xf32>
    %170 = arith.mulf %169, %165 : vector<8x16xf32>
    %171 = arith.mulf %170, %165 : vector<8x16xf32>
    %cst_61 = arith.constant 5.000000e-01 : f32
    %172 = vector.broadcast %cst_61 : f32 to vector<8x16xf32>
    %173 = arith.subf %166, %172 : vector<8x16xf32>
    %174 = arith.select %168, %171, %173 : vector<8x16xi1>, vector<8x16xf32>
    %175 = arith.mulf %174, %24 : vector<8x16xf32>
    %176 = vector.shape_cast %175 : vector<8x16xf32> to vector<1x8x16xf32>
    %cst_62 = arith.constant dense<0.000000e+00> : vector<1xf32>
    %177 = vector.multi_reduction <add>, %176, %cst_62 [1, 2] : vector<1x8x16xf32> to vector<1xf32>
    %178 = vector.shape_cast %177 : vector<1xf32> to vector<1x1x1xf32>
    %179 = vector.extract %178[0, 0, 0] : f32 from vector<1x1x1xf32>
    %180 = arith.subf %23, %21 : vector<8x16xf32>
    %181 = math.absf %180 : vector<8x16xf32>
    %cst_63 = arith.constant 1.000000e+00 : f32
    %182 = vector.broadcast %cst_63 : f32 to vector<8x16xf32>
    %183 = arith.cmpf olt, %181, %182 : vector<8x16xf32>
    %cst_64 = arith.constant 5.000000e-01 : f32
    %184 = vector.broadcast %cst_64 : f32 to vector<8x16xf32>
    %185 = arith.mulf %184, %180 : vector<8x16xf32>
    %186 = arith.mulf %185, %180 : vector<8x16xf32>
    %cst_65 = arith.constant 5.000000e-01 : f32
    %187 = vector.broadcast %cst_65 : f32 to vector<8x16xf32>
    %188 = arith.subf %181, %187 : vector<8x16xf32>
    %189 = arith.select %183, %186, %188 : vector<8x16xi1>, vector<8x16xf32>
    %190 = arith.mulf %189, %24 : vector<8x16xf32>
    %191 = vector.shape_cast %190 : vector<8x16xf32> to vector<1x8x16xf32>
    %cst_66 = arith.constant dense<0.000000e+00> : vector<1xf32>
    %192 = vector.multi_reduction <add>, %191, %cst_66 [1, 2] : vector<1x8x16xf32> to vector<1xf32>
    %193 = vector.shape_cast %192 : vector<1xf32> to vector<1x1x1xf32>
    %194 = vector.extract %193[0, 0, 0] : f32 from vector<1x1x1xf32>
    %195 = arith.addf %179, %194 : f32
    %196 = vector.shape_cast %24 : vector<8x16xf32> to vector<1x8x16xf32>
    %cst_67 = arith.constant dense<0.000000e+00> : vector<1xf32>
    %197 = vector.multi_reduction <add>, %196, %cst_67 [1, 2] : vector<1x8x16xf32> to vector<1xf32>
    %198 = vector.shape_cast %197 : vector<1xf32> to vector<1x1x1xf32>
    %199 = vector.extract %198[0, 0, 0] : f32 from vector<1x1x1xf32>
    %200 = vector.shape_cast %36 : vector<8x1xf32> to vector<1x8x1xf32>
    %cst_68 = arith.constant dense<0.000000e+00> : vector<1xf32>
    %201 = vector.multi_reduction <add>, %200, %cst_68 [1, 2] : vector<1x8x1xf32> to vector<1xf32>
    %202 = vector.shape_cast %201 : vector<1xf32> to vector<1x1x1xf32>
    %203 = vector.extract %202[0, 0, 0] : f32 from vector<1x1x1xf32>
    %204 = vector.shape_cast %63 : vector<8x1xf32> to vector<1x8x1xf32>
    %cst_69 = arith.constant dense<0.000000e+00> : vector<1xf32>
    %205 = vector.multi_reduction <add>, %204, %cst_69 [1, 2] : vector<1x8x1xf32> to vector<1xf32>
    %206 = vector.shape_cast %205 : vector<1xf32> to vector<1x1x1xf32>
    %207 = vector.extract %206[0, 0, 0] : f32 from vector<1x1x1xf32>
    %208 = arith.addf %203, %207 : f32
    %209 = tpu.iota {dimensions = array<i32: 1>} : vector<1x8x128xi32>
    %210 = tpu.iota {dimensions = array<i32: 2>} : vector<1x8x128xi32>
    %c0_i32 = arith.constant 0 : i32
    %211 = vector.broadcast %c0_i32 : i32 to vector<1x8x128xi32>
    %212 = arith.cmpi eq, %209, %211 : vector<1x8x128xi32>
    %c0_i32_70 = arith.constant 0 : i32
    %213 = vector.broadcast %c0_i32_70 : i32 to vector<1x8x128xi32>
    %214 = arith.cmpi eq, %210, %213 : vector<1x8x128xi32>
    %215 = arith.andi %212, %214 : vector<1x8x128xi1>
    %cst_71 = arith.constant 0.000000e+00 : f32
    %216 = vector.broadcast %164 : f32 to vector<1x8x128xf32>
    %217 = vector.broadcast %cst_71 : f32 to vector<1x8x128xf32>
    %218 = arith.select %215, %216, %217 : vector<1x8x128xi1>, vector<1x8x128xf32>
    %c1_i32 = arith.constant 1 : i32
    %219 = vector.broadcast %c1_i32 : i32 to vector<1x8x128xi32>
    %220 = arith.cmpi eq, %210, %219 : vector<1x8x128xi32>
    %221 = arith.andi %212, %220 : vector<1x8x128xi1>
    %cst_72 = arith.constant 0.000000e+00 : f32
    %222 = vector.broadcast %195 : f32 to vector<1x8x128xf32>
    %223 = vector.broadcast %cst_72 : f32 to vector<1x8x128xf32>
    %224 = arith.select %221, %222, %223 : vector<1x8x128xi1>, vector<1x8x128xf32>
    %225 = arith.addf %218, %224 : vector<1x8x128xf32>
    %c2_i32 = arith.constant 2 : i32
    %226 = vector.broadcast %c2_i32 : i32 to vector<1x8x128xi32>
    %227 = arith.cmpi eq, %210, %226 : vector<1x8x128xi32>
    %228 = arith.andi %212, %227 : vector<1x8x128xi1>
    %cst_73 = arith.constant 0.000000e+00 : f32
    %229 = vector.broadcast %199 : f32 to vector<1x8x128xf32>
    %230 = vector.broadcast %cst_73 : f32 to vector<1x8x128xf32>
    %231 = arith.select %228, %229, %230 : vector<1x8x128xi1>, vector<1x8x128xf32>
    %232 = arith.addf %225, %231 : vector<1x8x128xf32>
    %c3_i32 = arith.constant 3 : i32
    %233 = vector.broadcast %c3_i32 : i32 to vector<1x8x128xi32>
    %234 = arith.cmpi eq, %210, %233 : vector<1x8x128xi32>
    %235 = arith.andi %212, %234 : vector<1x8x128xi1>
    %cst_74 = arith.constant 0.000000e+00 : f32
    %236 = vector.broadcast %208 : f32 to vector<1x8x128xf32>
    %237 = vector.broadcast %cst_74 : f32 to vector<1x8x128xf32>
    %238 = arith.select %235, %236, %237 : vector<1x8x128xi1>, vector<1x8x128xf32>
    %239 = arith.addf %232, %238 : vector<1x8x128xf32>
    %c0_75 = arith.constant 0 : index
    %c0_76 = arith.constant 0 : index
    %c0_77 = arith.constant 0 : index
    %240 = vector.load %arg8[%c0_75, %c0_76, %c0_77] : memref<1x8x128xf32, #tpu.memory_space<vmem>>, vector<1x8x128xf32>
    tpu.vector_store %arg8[%c0_75, %c0_76, %c0_77], %239 {strides = array<i32>} : memref<1x8x128xf32, #tpu.memory_space<vmem>>, vector<1x8x128xf32>,
    return
  }
  func.func @transform_0(%arg0: i32) -> (i32, i32) {
    %c0_i32 = arith.constant 0 : i32
    %c0_i32_0 = arith.constant 0 : i32
    return %arg0, %c0_i32 : i32, i32
  }
  func.func @transform_1(%arg0: i32) -> (i32, i32) {
    %c0_i32 = arith.constant 0 : i32
    %c0_i32_0 = arith.constant 0 : i32
    return %arg0, %c0_i32 : i32, i32
  }
  func.func @transform_2(%arg0: i32) -> (i32, i32) {
    %c0_i32 = arith.constant 0 : i32
    %c0_i32_0 = arith.constant 0 : i32
    return %arg0, %c0_i32 : i32, i32
  }
  func.func @transform_3(%arg0: i32) -> (i32, i32) {
    %c0_i32 = arith.constant 0 : i32
    %c0_i32_0 = arith.constant 0 : i32
    return %arg0, %c0_i32 : i32, i32
  }
  func.func @transform_4(%arg0: i32) -> (i32, i32) {
    %c0_i32 = arith.constant 0 : i32
    %c0_i32_0 = arith.constant 0 : i32
    return %arg0, %c0_i32 : i32, i32
  }
  func.func @transform_5(%arg0: i32) -> (i32, i32) {
    %c0_i32 = arith.constant 0 : i32
    %c0_i32_0 = arith.constant 0 : i32
    return %arg0, %c0_i32 : i32, i32
  }
  func.func @transform_6(%arg0: i32) -> (i32, i32) {
    %c0_i32 = arith.constant 0 : i32
    %c0_i32_0 = arith.constant 0 : i32
    return %arg0, %c0_i32 : i32, i32
  }
  func.func @transform_7(%arg0: i32) -> (i32, i32, i32) {
    %c0_i32 = arith.constant 0 : i32
    %c0_i32_0 = arith.constant 0 : i32
    %c0_i32_1 = arith.constant 0 : i32
    return %arg0, %c0_i32, %c0_i32_0 : i32, i32, i32
  }
}

</mosaic_0001>

<llo_original>
// kernel: tpu_custom_call.1
$region0: #{tpu_custom_call.1}
  #allocation0 [shape = 'u32[]', space=smem, size = 0x4, offset = 0x4, fixed_abs, tag = 'smem constant byte address 0x4 - core index']
  #allocation1 [shape = 'u32[72,128]{1,0:T(1,128)}', space=vmem, size = 0x9000, scoped, tag = 'internal scratch']
  %s0 = inlined_call_operand.hbm [shape: f32[16,16], index: 0, kind: input, shape index: {}]
  %s1 = inlined_call_operand.hbm [shape: f32[16,16], index: 1, kind: input, shape index: {}]
  %s2 = inlined_call_operand.hbm [shape: f32[16,16], index: 2, kind: input, shape index: {}]
  %s3 = inlined_call_operand.hbm [shape: f32[16,16], index: 3, kind: input, shape index: {}]
  %s4 = inlined_call_operand.hbm [shape: f32[16,16], index: 4, kind: input, shape index: {}]
  %s5 = inlined_call_operand.hbm [shape: f32[16,16], index: 5, kind: input, shape index: {}]
  %s6 = inlined_call_operand.hbm [shape: f32[16,16], index: 6, kind: input, shape index: {}]
  %s7 = inlined_call_operand.hbm [shape: f32[2,8,128], index: 7, kind: output, shape index: {}]
  %s8 = sld [smem:[#allocation0]]
  $region89: #{tpu_custom_call.1} parent=0
    _
  %s10 = ssub.s32 1, %s8
  %s11 = scalar_select 0, %s10, %s8
  $region1: #{tpu_custom_call.1} parent=0
    #allocation2 [shape = 'u8[8192]{0}', space=vmem, size = 0x2000, scoped, tag = 'input window, operand 0']
    #allocation3 [shape = 's32[2]{0}', space=sflag, size = 0x8, scoped, tag = 'scoped memory for tpu_custom_call.1']
    #allocation4 [shape = 's32[2]{0}', space=sflag, size = 0x8, scoped, tag = 'scoped memory for tpu_custom_call.1']
    #allocation5 [shape = 'u8[8192]{0}', space=vmem, size = 0x2000, scoped, tag = 'input window, operand 1']
    #allocation6 [shape = 's32[2]{0}', space=sflag, size = 0x8, scoped, tag = 'scoped memory for tpu_custom_call.1']
    #allocation7 [shape = 'u8[8192]{0}', space=vmem, size = 0x2000, scoped, tag = 'input window, operand 2']
    #allocation8 [shape = 'u8[8192]{0}', space=vmem, size = 0x2000, scoped, tag = 'input window, operand 3']
    #allocation9 [shape = 's32[2]{0}', space=sflag, size = 0x8, scoped, tag = 'scoped memory for tpu_custom_call.1']
    #allocation10 [shape = 'u8[8192]{0}', space=vmem, size = 0x2000, scoped, tag = 'input window, operand 4']
    #allocation11 [shape = 'u8[8192]{0}', space=vmem, size = 0x2000, scoped, tag = 'input window, operand 5']
    #allocation12 [shape = 's32[2]{0}', space=sflag, size = 0x8, scoped, tag = 'scoped memory for tpu_custom_call.1']
    #allocation13 [shape = 'u8[8192]{0}', space=vmem, size = 0x2000, scoped, tag = 'input window, operand 6']
    #allocation14 [shape = 'u8[8192]{0}', space=vmem, size = 0x2000, scoped, tag = 'output window, operand 0']
    %12 = vsyncpa [#allocation3], 0
    %s13 = scalar_lea.sflag [#allocation3], 1
    %14 = vsyncpa %s13, 0
    %15 = vsyncpa [#allocation6], 0
    %s16 = scalar_lea.sflag [#allocation6], 1
    %17 = vsyncpa %s16, 0
    %18 = vsyncpa [#allocation9], 0
    %s19 = scalar_lea.sflag [#allocation9], 1
    %20 = vsyncpa %s19, 0
    %21 = vsyncpa [#allocation12], 0
    %s22 = scalar_lea.sflag [#allocation12], 1
    %23 = vsyncpa %s22, 0
    %24 = vsyncpa [#allocation4], 0
    %s25 = scalar_lea.sflag [#allocation4], 1
    %26 = vsyncpa %s25, 0
    loop: start=0, step=1, limit=4
    $region2: #{tpu_custom_call.1} parent=1 // loop_pre_header
      _
    $region3: #{tpu_custom_call.1} parent=1 // loop_header
      %s28 = sphi 0, %s32
      %p29 = scmp.ge.s32.totalorder %s28, 4
      %s38 = sphi 0, %s40
      %s41 = sphi 0, %s38
      %s42 = sphi 0, %s41
      %s58 = sphi 0, %s42
      %s64 = sphi 0, %s66
      %s67 = sphi 0, %s64
      %s68 = sphi 0, %s67
      %s84 = sphi 0, %s68
      %s90 = sphi 0, %s92
      %s93 = sphi 0, %s90
      %s94 = sphi 0, %s93
      %s110 = sphi 0, %s94
      %s116 = sphi 0, %s118
      %s119 = sphi 0, %s116
      %s120 = sphi 0, %s119
      %s136 = sphi 0, %s120
      %s142 = sphi 0, %s144
      %s145 = sphi 0, %s142
      %s146 = sphi 0, %s145
      %s162 = sphi 0, %s146
      %s168 = sphi 0, %s170
      %s171 = sphi 0, %s168
      %s172 = sphi 0, %s171
      %s188 = sphi 0, %s172
      %s194 = sphi 0, %s196
      %s197 = sphi 0, %s194
      %s198 = sphi 0, %s197
      %s214 = sphi 0, %s198
      %s220 = sphi 0, %s222
      %s223 = sphi 0, %s220
      %s224 = sphi 0, %s223
      %s240 = sphi 0, %s224
    $region4: #{tpu_custom_call.1} parent=1 // loop_header_branch
      %31 = sbr.rel (%p29) target = $region8
    $region5: #{tpu_custom_call.1} parent=1 // loop_body
      %s33 = ssub.s32 %s28, 1
      %s34 = ssub.s32 %s28, 2
      %s35 = sadd.s32 %s28, 1
      %s36 = ssub.s32 %s28, %s35
      %p37 = scmp.eq.s32.totalorder %s36, 0
      %s39 = sadd.s32 %s38, 1
      %s40 = scalar_select %p37, %s38, %s39
      %p43 = pneg %p37
      %p44 = scmp.eq.s32.totalorder %s28, 1
      %p45 = por %p43, %p44
      %p46 = scmp.ne.s32.totalorder %s38, %s41
      %p47 = scmp.eq.s32.totalorder %s28, 0
      %p48 = por %p46, %p47
      %p49 = scmp.ne.s32.totalorder %s38, %s41
      %p50 = scmp.eq.s32.totalorder %s33, 1
      %p51 = por %p49, %p50
      %p52 = scmp.ne.s32.totalorder %s41, %s42
      %p53 = scmp.eq.s32.totalorder %s33, 0
      %p54 = por %p52, %p53
      %p55 = scmp.ne.s32.totalorder %s41, %s42
      %p56 = scmp.eq.s32.totalorder %s34, 1
      %p57 = por %p55, %p56
      %p59 = scmp.ne.s32.totalorder %s42, %s58
      %p60 = scmp.eq.s32.totalorder %s34, 0
      %p61 = por %p59, %p60
      %s62 = ssub.s32 %s28, %s35
      %p63 = scmp.eq.s32.totalorder %s62, 0
      %s65 = sadd.s32 %s64, 1
      %s66 = scalar_select %p63, %s64, %s65
      %p69 = pneg %p63
      %p70 = scmp.eq.s32.totalorder %s28, 1
      %p71 = por %p69, %p70
      %p72 = scmp.ne.s32.totalorder %s64, %s67
      %p73 = scmp.eq.s32.totalorder %s28, 0
      %p74 = por %p72, %p73
      %p75 = scmp.ne.s32.totalorder %s64, %s67
      %p76 = scmp.eq.s32.totalorder %s33, 1
      %p77 = por %p75, %p76
      %p78 = scmp.ne.s32.totalorder %s67, %s68
      %p79 = scmp.eq.s32.totalorder %s33, 0
      %p80 = por %p78, %p79
      %p81 = scmp.ne.s32.totalorder %s67, %s68
      %p82 = scmp.eq.s32.totalorder %s34, 1
      %p83 = por %p81, %p82
      %p85 = scmp.ne.s32.totalorder %s68, %s84
      %p86 = scmp.eq.s32.totalorder %s34, 0
      %p87 = por %p85, %p86
      %s88 = ssub.s32 %s28, %s35
      %p89 = scmp.eq.s32.totalorder %s88, 0
      %s91 = sadd.s32 %s90, 1
      %s92 = scalar_select %p89, %s90, %s91
      %p95 = pneg %p89
      %p96 = scmp.eq.s32.totalorder %s28, 1
      %p97 = por %p95, %p96
      %p98 = scmp.ne.s32.totalorder %s90, %s93
      %p99 = scmp.eq.s32.totalorder %s28, 0
      %p100 = por %p98, %p99
      %p101 = scmp.ne.s32.totalorder %s90, %s93
      %p102 = scmp.eq.s32.totalorder %s33, 1
      %p103 = por %p101, %p102
      %p104 = scmp.ne.s32.totalorder %s93, %s94
      %p105 = scmp.eq.s32.totalorder %s33, 0
      %p106 = por %p104, %p105
      %p107 = scmp.ne.s32.totalorder %s93, %s94
      %p108 = scmp.eq.s32.totalorder %s34, 1
      %p109 = por %p107, %p108
      %p111 = scmp.ne.s32.totalorder %s94, %s110
      %p112 = scmp.eq.s32.totalorder %s34, 0
      %p113 = por %p111, %p112
      %s114 = ssub.s32 %s28, %s35
      %p115 = scmp.eq.s32.totalorder %s114, 0
      %s117 = sadd.s32 %s116, 1
      %s118 = scalar_select %p115, %s116, %s117
      %p121 = pneg %p115
      %p122 = scmp.eq.s32.totalorder %s28, 1
      %p123 = por %p121, %p122
      %p124 = scmp.ne.s32.totalorder %s116, %s119
      %p125 = scmp.eq.s32.totalorder %s28, 0
      %p126 = por %p124, %p125
      %p127 = scmp.ne.s32.totalorder %s116, %s119
      %p128 = scmp.eq.s32.totalorder %s33, 1
      %p129 = por %p127, %p128
      %p130 = scmp.ne.s32.totalorder %s119, %s120
      %p131 = scmp.eq.s32.totalorder %s33, 0
      %p132 = por %p130, %p131
      %p133 = scmp.ne.s32.totalorder %s119, %s120
      %p134 = scmp.eq.s32.totalorder %s34, 1
      %p135 = por %p133, %p134
      %p137 = scmp.ne.s32.totalorder %s120, %s136
      %p138 = scmp.eq.s32.totalorder %s34, 0
      %p139 = por %p137, %p138
      %s140 = ssub.s32 %s28, %s35
      %p141 = scmp.eq.s32.totalorder %s140, 0
      %s143 = sadd.s32 %s142, 1
      %s144 = scalar_select %p141, %s142, %s143
      %p147 = pneg %p141
      %p148 = scmp.eq.s32.totalorder %s28, 1
      %p149 = por %p147, %p148
      %p150 = scmp.ne.s32.totalorder %s142, %s145
      %p151 = scmp.eq.s32.totalorder %s28, 0
      %p152 = por %p150, %p151
      %p153 = scmp.ne.s32.totalorder %s142, %s145
      %p154 = scmp.eq.s32.totalorder %s33, 1
      %p155 = por %p153, %p154
      %p156 = scmp.ne.s32.totalorder %s145, %s146
      %p157 = scmp.eq.s32.totalorder %s33, 0
      %p158 = por %p156, %p157
      %p159 = scmp.ne.s32.totalorder %s145, %s146
      %p160 = scmp.eq.s32.totalorder %s34, 1
      %p161 = por %p159, %p160
      %p163 = scmp.ne.s32.totalorder %s146, %s162
      %p164 = scmp.eq.s32.totalorder %s34, 0
      %p165 = por %p163, %p164
      %s166 = ssub.s32 %s28, %s35
      %p167 = scmp.eq.s32.totalorder %s166, 0
      %s169 = sadd.s32 %s168, 1
      %s170 = scalar_select %p167, %s168, %s169
      %p173 = pneg %p167
      %p174 = scmp.eq.s32.totalorder %s28, 1
      %p175 = por %p173, %p174
      %p176 = scmp.ne.s32.totalorder %s168, %s171
      %p177 = scmp.eq.s32.totalorder %s28, 0
      %p178 = por %p176, %p177
      %p179 = scmp.ne.s32.totalorder %s168, %s171
      %p180 = scmp.eq.s32.totalorder %s33, 1
      %p181 = por %p179, %p180
      %p182 = scmp.ne.s32.totalorder %s171, %s172
      %p183 = scmp.eq.s32.totalorder %s33, 0
      %p184 = por %p182, %p183
      %p185 = scmp.ne.s32.totalorder %s171, %s172
      %p186 = scmp.eq.s32.totalorder %s34, 1
      %p187 = por %p185, %p186
      %p189 = scmp.ne.s32.totalorder %s172, %s188
      %p190 = scmp.eq.s32.totalorder %s34, 0
      %p191 = por %p189, %p190
      %s192 = ssub.s32 %s28, %s35
      %p193 = scmp.eq.s32.totalorder %s192, 0
      %s195 = sadd.s32 %s194, 1
      %s196 = scalar_select %p193, %s194, %s195
      %p199 = pneg %p193
      %p200 = scmp.eq.s32.totalorder %s28, 1
      %p201 = por %p199, %p200
      %p202 = scmp.ne.s32.totalorder %s194, %s197
      %p203 = scmp.eq.s32.totalorder %s28, 0
      %p204 = por %p202, %p203
      %p205 = scmp.ne.s32.totalorder %s194, %s197
      %p206 = scmp.eq.s32.totalorder %s33, 1
      %p207 = por %p205, %p206
      %p208 = scmp.ne.s32.totalorder %s197, %s198
      %p209 = scmp.eq.s32.totalorder %s33, 0
      %p210 = por %p208, %p209
      %p211 = scmp.ne.s32.totalorder %s197, %s198
      %p212 = scmp.eq.s32.totalorder %s34, 1
      %p213 = por %p211, %p212
      %p215 = scmp.ne.s32.totalorder %s198, %s214
      %p216 = scmp.eq.s32.totalorder %s34, 0
      %p217 = por %p215, %p216
      %s218 = ssub.s32 %s28, %s35
      %p219 = scmp.eq.s32.totalorder %s218, 0
      %s221 = sadd.s32 %s220, 1
      %s222 = scalar_select %p219, %s220, %s221
      %p225 = pneg %p219
      %p226 = scmp.eq.s32.totalorder %s28, 1
      %p227 = por %p225, %p226
      %p228 = scmp.ne.s32.totalorder %s220, %s223
      %p229 = scmp.eq.s32.totalorder %s28, 0
      %p230 = por %p228, %p229
      %p231 = scmp.ne.s32.totalorder %s220, %s223
      %p232 = scmp.eq.s32.totalorder %s33, 1
      %p233 = por %p231, %p232
      %p234 = scmp.ne.s32.totalorder %s223, %s224
      %p235 = scmp.eq.s32.totalorder %s33, 0
      %p236 = por %p234, %p235
      %p237 = scmp.ne.s32.totalorder %s223, %s224
      %p238 = scmp.eq.s32.totalorder %s34, 1
      %p239 = por %p237, %p238
      %p241 = scmp.ne.s32.totalorder %s224, %s240
      %p242 = scmp.eq.s32.totalorder %s34, 0
      %p243 = por %p241, %p242
      %p244 = scmp.le.s32.totalorder 1, %s28
      %p245 = scmp.lt.s32.totalorder %s28, 3
      %p246 = pnand %p244, %p245
      %p247 = pneg %p246
      // Predicated region
      $region9: #{tpu_custom_call.1} parent=5 // pred_check
        _
      $region10: #{tpu_custom_call.1} parent=5 // pred_check_branch
        %249 = sbr.rel (%p246) target = $region12
      $region11: #{tpu_custom_call.1} parent=5 // pred_region
        %s250 = ssub.s32 %s28, 1
      $region12: #{tpu_custom_call.1} parent=5 // pred_fallthru
        _
      %p251 = scmp.lt.s32.totalorder %s28, 2
      // Predicated region
      $region13: #{tpu_custom_call.1} parent=5 // pred_check
        %p252 = pneg %p251
      $region14: #{tpu_custom_call.1} parent=5 // pred_check_branch
        %254 = sbr.rel (%p252) target = $region16
      $region15: #{tpu_custom_call.1} parent=5 // pred_region
        // Predicated region
        $region17: #{tpu_custom_call.1} parent=15 // pred_check
          %p255 = pneg %p48
        $region18: #{tpu_custom_call.1} parent=15 // pred_check_branch
          %257 = sbr.rel (%p255) target = $region20
        $region19: #{tpu_custom_call.1} parent=15 // pred_region
          %s258 = sand.u32 %s38, 1
          %s259 = scalar_lea.sflag [#allocation3], %s258
          %s260 = sand.u32 %s38, 1
          %s261 = smul.addr %s260, 8
          %s262 = scalar_lea.vmem [#allocation2], %s261
          %264 = vsyncadd %s259, 0
          %s265 = smul.addr %s28, 8
          %s266 = scalar_lea.hbm %s0, %s265
          %s268 = sshll.u32 %s266, 4
          %s269 = int_to_ptr.hbm [resolvable:$true] %s268
          %s270 = sshll.u32 %s262, 4
          %s271 = int_to_ptr.vmem [resolvable:$true] %s270
          %273 = dma.hbm_to_vmem [thread:$0]  %s269, 128, %s271, %s259
        $region20: #{tpu_custom_call.1} parent=15 // pred_fallthru
          _
        // Predicated region
        $region21: #{tpu_custom_call.1} parent=15 // pred_check
          %p274 = pneg %p74
        $region22: #{tpu_custom_call.1} parent=15 // pred_check_branch
          %276 = sbr.rel (%p274) target = $region24
        $region23: #{tpu_custom_call.1} parent=15 // pred_region
          %s277 = sand.u32 %s28, 1
          %s278 = scalar_lea.sflag [#allocation6], %s277
          %s279 = sand.u32 %s64, 1
          %s280 = smul.addr %s279, 8
          %s281 = scalar_lea.vmem [#allocation5], %s280
          %283 = vsyncadd %s278, 0
          %s284 = smul.addr %s28, 8
          %s285 = scalar_lea.hbm %s1, %s284
          %s287 = sshll.u32 %s285, 4
          %s288 = int_to_ptr.hbm [resolvable:$true] %s287
          %s289 = sshll.u32 %s281, 4
          %s290 = int_to_ptr.vmem [resolvable:$true] %s289
          %292 = dma.hbm_to_vmem [thread:$0]  %s288, 128, %s290, %s278
        $region24: #{tpu_custom_call.1} parent=15 // pred_fallthru
          _
        // Predicated region
        $region25: #{tpu_custom_call.1} parent=15 // pred_check
          %p293 = pneg %p100
        $region26: #{tpu_custom_call.1} parent=15 // pred_check_branch
          %295 = sbr.rel (%p293) target = $region28
        $region27: #{tpu_custom_call.1} parent=15 // pred_region
          %s296 = sand.u32 %s28, 1
          %s297 = scalar_lea.sflag [#allocation6], %s296
          %s298 = sand.u32 %s90, 1
          %s299 = smul.addr %s298, 8
          %s300 = scalar_lea.vmem [#allocation7], %s299
          %302 = vsyncadd %s297, 0
          %s303 = smul.addr %s28, 8
          %s304 = scalar_lea.hbm %s2, %s303
          %s306 = sshll.u32 %s304, 4
          %s307 = int_to_ptr.hbm [resolvable:$true] %s306
          %s308 = sshll.u32 %s300, 4
          %s309 = int_to_ptr.vmem [resolvable:$true] %s308
          %311 = dma.hbm_to_vmem [thread:$0]  %s307, 128, %s309, %s297
        $region28: #{tpu_custom_call.1} parent=15 // pred_fallthru
          _
        // Predicated region
        $region29: #{tpu_custom_call.1} parent=15 // pred_check
          %p312 = pneg %p126
        $region30: #{tpu_custom_call.1} parent=15 // pred_check_branch
          %314 = sbr.rel (%p312) target = $region32
        $region31: #{tpu_custom_call.1} parent=15 // pred_region
          %s315 = sand.u32 %s28, 1
          %s316 = scalar_lea.sflag [#allocation9], %s315
          %s317 = sand.u32 %s116, 1
          %s318 = smul.addr %s317, 8
          %s319 = scalar_lea.vmem [#allocation8], %s318
          %321 = vsyncadd %s316, 0
          %s322 = smul.addr %s28, 8
          %s323 = scalar_lea.hbm %s3, %s322
          %s325 = sshll.u32 %s323, 4
          %s326 = int_to_ptr.hbm [resolvable:$true] %s325
          %s327 = sshll.u32 %s319, 4
          %s328 = int_to_ptr.vmem [resolvable:$true] %s327
          %330 = dma.hbm_to_vmem [thread:$0]  %s326, 128, %s328, %s316
        $region32: #{tpu_custom_call.1} parent=15 // pred_fallthru
          _
        // Predicated region
        $region33: #{tpu_custom_call.1} parent=15 // pred_check
          %p331 = pneg %p152
        $region34: #{tpu_custom_call.1} parent=15 // pred_check_branch
          %333 = sbr.rel (%p331) target = $region36
        $region35: #{tpu_custom_call.1} parent=15 // pred_region
          %s334 = sand.u32 %s28, 1
          %s335 = scalar_lea.sflag [#allocation9], %s334
          %s336 = sand.u32 %s142, 1
          %s337 = smul.addr %s336, 8
          %s338 = scalar_lea.vmem [#allocation10], %s337
          %340 = vsyncadd %s335, 0
          %s341 = smul.addr %s28, 8
          %s342 = scalar_lea.hbm %s4, %s341
          %s344 = sshll.u32 %s342, 4
          %s345 = int_to_ptr.hbm [resolvable:$true] %s344
          %s346 = sshll.u32 %s338, 4
          %s347 = int_to_ptr.vmem [resolvable:$true] %s346
          %349 = dma.hbm_to_vmem [thread:$0]  %s345, 128, %s347, %s335
        $region36: #{tpu_custom_call.1} parent=15 // pred_fallthru
          _
        // Predicated region
        $region37: #{tpu_custom_call.1} parent=15 // pred_check
          %p350 = pneg %p178
        $region38: #{tpu_custom_call.1} parent=15 // pred_check_branch
          %352 = sbr.rel (%p350) target = $region40
        $region39: #{tpu_custom_call.1} parent=15 // pred_region
          %s353 = sand.u32 %s28, 1
          %s354 = scalar_lea.sflag [#allocation12], %s353
          %s355 = sand.u32 %s168, 1
          %s356 = smul.addr %s355, 8
          %s357 = scalar_lea.vmem [#allocation11], %s356
          %359 = vsyncadd %s354, 0
          %s360 = smul.addr %s28, 8
          %s361 = scalar_lea.hbm %s5, %s360
          %s363 = sshll.u32 %s361, 4
          %s364 = int_to_ptr.hbm [resolvable:$true] %s363
          %s365 = sshll.u32 %s357, 4
          %s366 = int_to_ptr.vmem [resolvable:$true] %s365
          %368 = dma.hbm_to_vmem [thread:$0]  %s364, 128, %s366, %s354
        $region40: #{tpu_custom_call.1} parent=15 // pred_fallthru
          _
        // Predicated region
        $region41: #{tpu_custom_call.1} parent=15 // pred_check
          %p369 = pneg %p204
        $region42: #{tpu_custom_call.1} parent=15 // pred_check_branch
          %371 = sbr.rel (%p369) target = $region44
        $region43: #{tpu_custom_call.1} parent=15 // pred_region
          %s372 = sand.u32 %s28, 1
          %s373 = scalar_lea.sflag [#allocation12], %s372
          %s374 = sand.u32 %s194, 1
          %s375 = smul.addr %s374, 8
          %s376 = scalar_lea.vmem [#allocation13], %s375
          %378 = vsyncadd %s373, 0
          %s379 = smul.addr %s28, 8
          %s380 = scalar_lea.hbm %s6, %s379
          %s382 = sshll.u32 %s380, 4
          %s383 = int_to_ptr.hbm [resolvable:$true] %s382
          %s384 = sshll.u32 %s376, 4
          %s385 = int_to_ptr.vmem [resolvable:$true] %s384
          %387 = dma.hbm_to_vmem [thread:$0]  %s383, 128, %s385, %s373
        $region44: #{tpu_custom_call.1} parent=15 // pred_fallthru
          _
      $region16: #{tpu_custom_call.1} parent=5 // pred_fallthru
        _
      %p388 = scmp.le.s32.totalorder 1, %s28
      %p389 = scmp.lt.s32.totalorder %s28, 3
      %p390 = pnand %p388, %p389
      %p391 = pneg %p390
      // Predicated region
      $region45: #{tpu_custom_call.1} parent=5 // pred_check
        _
      $region46: #{tpu_custom_call.1} parent=5 // pred_check_branch
        %393 = sbr.rel (%p390) target = $region48
      $region47: #{tpu_custom_call.1} parent=5 // pred_region
        %s394 = ssub.s32 %s28, 1
        %s395 = sand.u32 %s41, 1
        %s396 = scalar_lea.sflag [#allocation3], %s395
        %s397 = sand.u32 %s41, 1
        %s398 = smul.addr %s397, 8
        %s399 = scalar_lea.vmem [#allocation2], %s398
        // Predicated region
        $region49: #{tpu_custom_call.1} parent=47 // pred_check
          %p400 = pneg %p54
        $region50: #{tpu_custom_call.1} parent=47 // pred_check_branch
          %402 = sbr.rel (%p400) target = $region52
        $region51: #{tpu_custom_call.1} parent=47 // pred_region
          %404 = dma.done %s396, 128
        $region52: #{tpu_custom_call.1} parent=47 // pred_fallthru
          _
        %s405 = sand.u32 %s33, 1
        %s406 = scalar_lea.sflag [#allocation6], %s405
        %s407 = sand.u32 %s67, 1
        %s408 = smul.addr %s407, 8
        %s409 = scalar_lea.vmem [#allocation5], %s408
        // Predicated region
        $region53: #{tpu_custom_call.1} parent=47 // pred_check
          %p410 = pneg %p80
        $region54: #{tpu_custom_call.1} parent=47 // pred_check_branch
          %412 = sbr.rel (%p410) target = $region56
        $region55: #{tpu_custom_call.1} parent=47 // pred_region
          %414 = dma.done %s406, 128
        $region56: #{tpu_custom_call.1} parent=47 // pred_fallthru
          _
        %s415 = sand.u32 %s33, 1
        %s416 = scalar_lea.sflag [#allocation6], %s415
        %s417 = sand.u32 %s93, 1
        %s418 = smul.addr %s417, 8
        %s419 = scalar_lea.vmem [#allocation7], %s418
        // Predicated region
        $region57: #{tpu_custom_call.1} parent=47 // pred_check
          %p420 = pneg %p106
        $region58: #{tpu_custom_call.1} parent=47 // pred_check_branch
          %422 = sbr.rel (%p420) target = $region60
        $region59: #{tpu_custom_call.1} parent=47 // pred_region
          %424 = dma.done %s416, 128
        $region60: #{tpu_custom_call.1} parent=47 // pred_fallthru
          _
        %s425 = sand.u32 %s33, 1
        %s426 = scalar_lea.sflag [#allocation9], %s425
        %s427 = sand.u32 %s119, 1
        %s428 = smul.addr %s427, 8
        %s429 = scalar_lea.vmem [#allocation8], %s428
        // Predicated region
        $region61: #{tpu_custom_call.1} parent=47 // pred_check
          %p430 = pneg %p132
        $region62: #{tpu_custom_call.1} parent=47 // pred_check_branch
          %432 = sbr.rel (%p430) target = $region64
        $region63: #{tpu_custom_call.1} parent=47 // pred_region
          %434 = dma.done %s426, 128
        $region64: #{tpu_custom_call.1} parent=47 // pred_fallthru
          _
        %s435 = sand.u32 %s33, 1
        %s436 = scalar_lea.sflag [#allocation9], %s435
        %s437 = sand.u32 %s145, 1
        %s438 = smul.addr %s437, 8
        %s439 = scalar_lea.vmem [#allocation10], %s438
        // Predicated region
        $region65: #{tpu_custom_call.1} parent=47 // pred_check
          %p440 = pneg %p158
        $region66: #{tpu_custom_call.1} parent=47 // pred_check_branch
          %442 = sbr.rel (%p440) target = $region68
        $region67: #{tpu_custom_call.1} parent=47 // pred_region
          %444 = dma.done %s436, 128
        $region68: #{tpu_custom_call.1} parent=47 // pred_fallthru
          _
        %s445 = sand.u32 %s33, 1
        %s446 = scalar_lea.sflag [#allocation12], %s445
        %s447 = sand.u32 %s171, 1
        %s448 = smul.addr %s447, 8
        %s449 = scalar_lea.vmem [#allocation11], %s448
        // Predicated region
        $region69: #{tpu_custom_call.1} parent=47 // pred_check
          %p450 = pneg %p184
        $region70: #{tpu_custom_call.1} parent=47 // pred_check_branch
          %452 = sbr.rel (%p450) target = $region72
        $region71: #{tpu_custom_call.1} parent=47 // pred_region
          %454 = dma.done %s446, 128
        $region72: #{tpu_custom_call.1} parent=47 // pred_fallthru
          _
        %s455 = sand.u32 %s33, 1
        %s456 = scalar_lea.sflag [#allocation12], %s455
        %s457 = sand.u32 %s197, 1
        %s458 = smul.addr %s457, 8
        %s459 = scalar_lea.vmem [#allocation13], %s458
        // Predicated region
        $region73: #{tpu_custom_call.1} parent=47 // pred_check
          %p460 = pneg %p210
        $region74: #{tpu_custom_call.1} parent=47 // pred_check_branch
          %462 = sbr.rel (%p460) target = $region76
        $region75: #{tpu_custom_call.1} parent=47 // pred_region
          %464 = dma.done %s456, 128
        $region76: #{tpu_custom_call.1} parent=47 // pred_fallthru
          _
        %s465 = sand.u32 %s41, 1
        %s466 = scalar_lea.sflag [#allocation3], %s465
        %s467 = sand.u32 %s41, 1
        %s468 = smul.addr %s467, 8
        %s469 = scalar_lea.vmem [#allocation2], %s468
        %p470 = pneg %p54
        %p471 = pneg %p51
        %s472 = sand.u32 %s33, 1
        %s473 = scalar_lea.sflag [#allocation6], %s472
        %s474 = sand.u32 %s67, 1
        %s475 = smul.addr %s474, 8
        %s476 = scalar_lea.vmem [#allocation5], %s475
        %p477 = pneg %p80
        %p478 = pneg %p77
        %s479 = sand.u32 %s33, 1
        %s480 = scalar_lea.sflag [#allocation6], %s479
        %s481 = sand.u32 %s93, 1
        %s482 = smul.addr %s481, 8
        %s483 = scalar_lea.vmem [#allocation7], %s482
        %p484 = pneg %p106
        %p485 = pneg %p103
        %s486 = sand.u32 %s33, 1
        %s487 = scalar_lea.sflag [#allocation9], %s486
        %s488 = sand.u32 %s119, 1
        %s489 = smul.addr %s488, 8
        %s490 = scalar_lea.vmem [#allocation8], %s489
        %p491 = pneg %p132
        %p492 = pneg %p129
        %s493 = sand.u32 %s33, 1
        %s494 = scalar_lea.sflag [#allocation9], %s493
        %s495 = sand.u32 %s145, 1
        %s496 = smul.addr %s495, 8
        %s497 = scalar_lea.vmem [#allocation10], %s496
        %p498 = pneg %p158
        %p499 = pneg %p155
        %s500 = sand.u32 %s33, 1
        %s501 = scalar_lea.sflag [#allocation12], %s500
        %s502 = sand.u32 %s171, 1
        %s503 = smul.addr %s502, 8
        %s504 = scalar_lea.vmem [#allocation11], %s503
        %p505 = pneg %p184
        %p506 = pneg %p181
        %s507 = sand.u32 %s33, 1
        %s508 = scalar_lea.sflag [#allocation12], %s507
        %s509 = sand.u32 %s197, 1
        %s510 = smul.addr %s509, 8
        %s511 = scalar_lea.vmem [#allocation13], %s510
        %p512 = pneg %p210
        %p513 = pneg %p207
        %p514 = pneg %p236
        %p515 = pneg %p233
        %s516 = sand.u32 %s223, 1
        %s517 = scalar_lea.sflag [#allocation4], %s516
        %s518 = sand.u32 %s223, 1
        %s519 = smul.addr %s518, 8
        %s520 = scalar_lea.vmem [#allocation14], %s519
        %v521 = vld [vmem:[%s399] sm:$0xff]
        %v522 = vxor.u32 %v521, 2147483648
        %v523 = vmul.f32 %v522, 1.442695
        %v524 = vpow.pop %v523
        %v525 = vadd.f32 %v524, 1.0
        %v526 = vrcp.pop %v525
        %v527 = vmul.f32 %v525, %v526
        %v528 = vsub.f32 1.0, %v527
        %v529 = vmul.f32 %v526, %v528
        %v530 = vadd.f32 %v526, %v529
        %vm531 = vweird.f32 %v525
        %vm532 = vweird.f32 %v526
        %vm533 = vmor %vm531, %vm532
        %v534 = vsel %vm533, %v526, %v530
        %v535 = vand.u32 2147483647, %v525
        %vm536 = vcmp.eq.f32.partialorder %v535, 8.507059e+37
        %v537 = vand.u32 %v525, 2147483648
        %v538 = vor.u32 1.1754944e-38, %v537
        %v539 = vsel %vm536, %v538, %v534
        %v540 = vmul.f32 1.0, %v539
        %v541 = vmax.f32 %v540, 0.0001
        %v542 = vmin.f32 %v541, 0.9999
        %v543 = vld [vmem:[%s409] sm:$0xff]
        %v544 = vxor.u32 %v543, 2147483648
        %v545 = vmul.f32 %v544, 1.442695
        %v546 = vpow.pop %v545
        %v547 = vadd.f32 %v546, 1.0
        %v548 = vrcp.pop %v547
        %v549 = vmul.f32 %v547, %v548
        %v550 = vsub.f32 1.0, %v549
        %v551 = vmul.f32 %v548, %v550
        %v552 = vadd.f32 %v548, %v551
        %vm553 = vweird.f32 %v547
        %vm554 = vweird.f32 %v548
        %vm555 = vmor %vm553, %vm554
        %v556 = vsel %vm555, %v548, %v552
        %v557 = vand.u32 2147483647, %v547
        %vm558 = vcmp.eq.f32.partialorder %v557, 8.507059e+37
        %v559 = vand.u32 %v547, 2147483648
        %v560 = vor.u32 1.1754944e-38, %v559
        %v561 = vsel %vm558, %v560, %v556
        %v562 = vmul.f32 1.0, %v561
        %v563 = vmax.f32 %v562, 0.0001
        %v564 = vmin.f32 %v563, 0.9999
        %v565 = vld [vmem:[%s419] sm:$0xff]
        %v566 = vld [vmem:[%s429] sm:$0xff]
        %v567 = vld [vmem:[%s439] sm:$0xff]
        %v568 = vld [vmem:[%s449] sm:$0xff]
        %v569 = vld [vmem:[%s459] sm:$0xff]
        %vm570 = vcmask 130048
        %v571 = vsel %vm570, %v569, 0.0
        %572 = vadd.xlane.f32.xlu0 %v571
        %v573 = vpop.xlane.xlu0 %572
        %v574 = vsub.f32 %v565, %v566
        %v575 = vmul.f32 %v574, 0.5
        %v576 = vmul.f32 %v575, %v574
        %v577 = vmul.f32 %v569, %v576
        %v578 = vsel %vm570, %v577, 0.0
        %579 = vadd.xlane.f32.xlu0 %v578
        %v580 = vpop.xlane.xlu0 %579
        %v581 = vadd.f32 %v573, 0.0001
        %v582 = vrcp.pop %v581
        %v583 = vmul.f32 %v581, %v582
        %v584 = vsub.f32 1.0, %v583
        %v585 = vmul.f32 %v582, %v584
        %v586 = vadd.f32 %v582, %v585
        %vm587 = vweird.f32 %v581
        %vm588 = vweird.f32 %v582
        %vm589 = vmor %vm587, %vm588
        %v590 = vsel %vm589, %v582, %v586
        %v591 = vand.u32 2147483647, %v581
        %vm592 = vcmp.eq.f32.partialorder %v591, 8.507059e+37
        %v593 = vand.u32 %v581, 2147483648
        %v594 = vor.u32 1.1754944e-38, %v593
        %v595 = vsel %vm592, %v594, %v590
        %v596 = vmul.f32 %v580, %v595
        %v597 = vadd.f32 %v565, %v566
        %v598 = vmul.f32 %v597, 0.5
        %v599 = vperm.slane %v598, 0
        %v600 = vlaneseq
        %v601 = vshrl.u32 %v600, 7
        %603 = vset.pattern.permute.xlu0 %v601
        %604 = vperm.xlu0 %603, %v599
        %v605 = vpop.permute.xlu0 %604
        %v606 = vlaneseq
        %v607 = vshrl.u32 %v606, 7
        %v608 = vadd.s32 %v607, 8
        %609 = vset.pattern.permute.xlu0 %v608
        %610 = vperm.xlu0 %609, %v599
        %v611 = vpop.permute.xlu0 %610
        %v612 = vperm.slane %v598, 1
        %v613 = vlaneseq
        %v614 = vshrl.u32 %v613, 7
        %616 = vset.pattern.permute.xlu0 %v614
        %617 = vperm.xlu0 %616, %v612
        %v618 = vpop.permute.xlu0 %617
        %v619 = vlaneseq
        %v620 = vshrl.u32 %v619, 7
        %v621 = vadd.s32 %v620, 8
        %622 = vset.pattern.permute.xlu0 %v621
        %623 = vperm.xlu0 %622, %v612
        %v624 = vpop.permute.xlu0 %623
        %v625 = vperm.slane %v598, 2
        %v626 = vlaneseq
        %v627 = vshrl.u32 %v626, 7
        %629 = vset.pattern.permute.xlu0 %v627
        %630 = vperm.xlu0 %629, %v625
        %v631 = vpop.permute.xlu0 %630
        %v632 = vlaneseq
        %v633 = vshrl.u32 %v632, 7
        %v634 = vadd.s32 %v633, 8
        %635 = vset.pattern.permute.xlu0 %v634
        %636 = vperm.xlu0 %635, %v625
        %v637 = vpop.permute.xlu0 %636
        %v638 = vperm.slane %v598, 3
        %v639 = vlaneseq
        %v640 = vshrl.u32 %v639, 7
        %642 = vset.pattern.permute.xlu0 %v640
        %643 = vperm.xlu0 %642, %v638
        %v644 = vpop.permute.xlu0 %643
        %v645 = vlaneseq
        %v646 = vshrl.u32 %v645, 7
        %v647 = vadd.s32 %v646, 8
        %648 = vset.pattern.permute.xlu0 %v647
        %649 = vperm.xlu0 %648, %v638
        %v650 = vpop.permute.xlu0 %649
        %v651 = vperm.slane %v598, 4
        %v652 = vlaneseq
        %v653 = vshrl.u32 %v652, 7
        %655 = vset.pattern.permute.xlu0 %v653
        %656 = vperm.xlu0 %655, %v651
        %v657 = vpop.permute.xlu0 %656
        %v658 = vlaneseq
        %v659 = vshrl.u32 %v658, 7
        %v660 = vadd.s32 %v659, 8
        %661 = vset.pattern.permute.xlu0 %v660
        %662 = vperm.xlu0 %661, %v651
        %v663 = vpop.permute.xlu0 %662
        %v664 = vperm.slane %v598, 5
        %v665 = vlaneseq
        %v666 = vshrl.u32 %v665, 7
        %668 = vset.pattern.permute.xlu0 %v666
        %669 = vperm.xlu0 %668, %v664
        %v670 = vpop.permute.xlu0 %669
        %v671 = vlaneseq
        %v672 = vshrl.u32 %v671, 7
        %v673 = vadd.s32 %v672, 8
        %674 = vset.pattern.permute.xlu0 %v673
        %675 = vperm.xlu0 %674, %v664
        %v676 = vpop.permute.xlu0 %675
        %v677 = vperm.slane %v598, 6
        %v678 = vlaneseq
        %v679 = vshrl.u32 %v678, 7
        %681 = vset.pattern.permute.xlu0 %v679
        %682 = vperm.xlu0 %681, %v677
        %v683 = vpop.permute.xlu0 %682
        %v684 = vlaneseq
        %v685 = vshrl.u32 %v684, 7
        %v686 = vadd.s32 %v685, 8
        %687 = vset.pattern.permute.xlu0 %v686
        %688 = vperm.xlu0 %687, %v677
        %v689 = vpop.permute.xlu0 %688
        %v690 = vperm.slane %v598, 7
        %v691 = vlaneseq
        %v692 = vshrl.u32 %v691, 7
        %694 = vset.pattern.permute.xlu0 %v692
        %695 = vperm.xlu0 %694, %v690
        %v696 = vpop.permute.xlu0 %695
        %v697 = vlaneseq
        %v698 = vshrl.u32 %v697, 7
        %v699 = vadd.s32 %v698, 8
        %700 = vset.pattern.permute.xlu0 %v699
        %701 = vperm.xlu0 %700, %v690
        %v702 = vpop.permute.xlu0 %701
        %v704 = vrot.slane %v598, 1
        %v705 = vrot.slane %v598, 2
        %v706 = vrot.slane %v598, 3
        %v707 = vrot.slane %v598, 4
        %v708 = vrot.slane %v598, 5
        %v709 = vrot.slane %v598, 6
        %v710 = vrot.slane %v598, 7
        %v711 = vperm.slane %v598, 0
        %v712 = vperm.slane %v704, 0
        %v713 = vperm.slane %v705, 0
        %v714 = vperm.slane %v706, 0
        %v715 = vperm.slane %v707, 0
        %v716 = vperm.slane %v708, 0
        %v717 = vperm.slane %v709, 0
        %v718 = vperm.slane %v710, 0
        %v727 = vsub.f32 %v605, %v711
        %v728 = vsub.f32 %v611, %v711
        %v729 = vsub.f32 %v618, %v712
        %v730 = vsub.f32 %v624, %v712
        %v731 = vsub.f32 %v631, %v713
        %v732 = vsub.f32 %v637, %v713
        %v733 = vsub.f32 %v644, %v714
        %v734 = vsub.f32 %v650, %v714
        %v735 = vsub.f32 %v657, %v715
        %v736 = vsub.f32 %v663, %v715
        %v737 = vsub.f32 %v670, %v716
        %v738 = vsub.f32 %v676, %v716
        %v739 = vsub.f32 %v683, %v717
        %v740 = vsub.f32 %v689, %v717
        %v741 = vsub.f32 %v696, %v718
        %v742 = vsub.f32 %v702, %v718
        %v743 = vand.u32 2147483647, %v727
        %v744 = vand.u32 2147483647, %v728
        %v745 = vand.u32 2147483647, %v729
        %v746 = vand.u32 2147483647, %v730
        %v747 = vand.u32 2147483647, %v731
        %v748 = vand.u32 2147483647, %v732
        %v749 = vand.u32 2147483647, %v733
        %v750 = vand.u32 2147483647, %v734
        %v751 = vand.u32 2147483647, %v735
        %v752 = vand.u32 2147483647, %v736
        %v753 = vand.u32 2147483647, %v737
        %v754 = vand.u32 2147483647, %v738
        %v755 = vand.u32 2147483647, %v739
        %v756 = vand.u32 2147483647, %v740
        %v757 = vand.u32 2147483647, %v741
        %v758 = vand.u32 2147483647, %v742
        %v759 = vsub.f32 1.0, %v743
        %v760 = vsub.f32 1.0, %v744
        %v761 = vsub.f32 1.0, %v745
        %v762 = vsub.f32 1.0, %v746
        %v763 = vsub.f32 1.0, %v747
        %v764 = vsub.f32 1.0, %v748
        %v765 = vsub.f32 1.0, %v749
        %v766 = vsub.f32 1.0, %v750
        %v767 = vsub.f32 1.0, %v751
        %v768 = vsub.f32 1.0, %v752
        %v769 = vsub.f32 1.0, %v753
        %v770 = vsub.f32 1.0, %v754
        %v771 = vsub.f32 1.0, %v755
        %v772 = vsub.f32 1.0, %v756
        %v773 = vsub.f32 1.0, %v757
        %v774 = vsub.f32 1.0, %v758
        %v775 = vmax.f32 %v759, 0.0
        %v776 = vmax.f32 %v760, 0.0
        %v777 = vmax.f32 %v761, 0.0
        %v778 = vmax.f32 %v762, 0.0
        %v779 = vmax.f32 %v763, 0.0
        %v780 = vmax.f32 %v764, 0.0
        %v781 = vmax.f32 %v765, 0.0
        %v782 = vmax.f32 %v766, 0.0
        %v783 = vmax.f32 %v767, 0.0
        %v784 = vmax.f32 %v768, 0.0
        %v785 = vmax.f32 %v769, 0.0
        %v786 = vmax.f32 %v770, 0.0
        %v787 = vmax.f32 %v771, 0.0
        %v788 = vmax.f32 %v772, 0.0
        %v789 = vmax.f32 %v773, 0.0
        %v790 = vmax.f32 %v774, 0.0
        %v792 = vrot.slane %v569, 1
        %v793 = vrot.slane %v569, 2
        %v794 = vrot.slane %v569, 3
        %v795 = vrot.slane %v569, 4
        %v796 = vrot.slane %v569, 5
        %v797 = vrot.slane %v569, 6
        %v798 = vrot.slane %v569, 7
        %v799 = vperm.slane %v569, 0
        %v800 = vperm.slane %v792, 0
        %v801 = vperm.slane %v793, 0
        %v802 = vperm.slane %v794, 0
        %v803 = vperm.slane %v795, 0
        %v804 = vperm.slane %v796, 0
        %v805 = vperm.slane %v797, 0
        %v806 = vperm.slane %v798, 0
        %v815 = vmul.f32 %v775, %v799
        %v816 = vmul.f32 %v776, %v799
        %v817 = vmul.f32 %v777, %v800
        %v818 = vmul.f32 %v778, %v800
        %v819 = vmul.f32 %v779, %v801
        %v820 = vmul.f32 %v780, %v801
        %v821 = vmul.f32 %v781, %v802
        %v822 = vmul.f32 %v782, %v802
        %v823 = vmul.f32 %v783, %v803
        %v824 = vmul.f32 %v784, %v803
        %v825 = vmul.f32 %v785, %v804
        %v826 = vmul.f32 %v786, %v804
        %v827 = vmul.f32 %v787, %v805
        %v828 = vmul.f32 %v788, %v805
        %v829 = vmul.f32 %v789, %v806
        %v830 = vmul.f32 %v790, %v806
        %v831 = vsel %vm570, %v815, 0.0
        %832 = vadd.xlane.f32.xlu0 %v831
        %v833 = vpop.xlane.xlu0 %832
        %v834 = vsel %vm570, %v816, 0.0
        %835 = vadd.xlane.f32.xlu0 %v834
        %v836 = vpop.xlane.xlu0 %835
        %v837 = vsel %vm570, %v817, 0.0
        %838 = vadd.xlane.f32.xlu0 %v837
        %v839 = vpop.xlane.xlu0 %838
        %v840 = vsel %vm570, %v818, 0.0
        %841 = vadd.xlane.f32.xlu0 %v840
        %v842 = vpop.xlane.xlu0 %841
        %v843 = vsel %vm570, %v819, 0.0
        %844 = vadd.xlane.f32.xlu0 %v843
        %v845 = vpop.xlane.xlu0 %844
        %v846 = vsel %vm570, %v820, 0.0
        %847 = vadd.xlane.f32.xlu0 %v846
        %v848 = vpop.xlane.xlu0 %847
        %v849 = vsel %vm570, %v821, 0.0
        %850 = vadd.xlane.f32.xlu0 %v849
        %v851 = vpop.xlane.xlu0 %850
        %v852 = vsel %vm570, %v822, 0.0
        %853 = vadd.xlane.f32.xlu0 %v852
        %v854 = vpop.xlane.xlu0 %853
        %v855 = vsel %vm570, %v823, 0.0
        %856 = vadd.xlane.f32.xlu0 %v855
        %v857 = vpop.xlane.xlu0 %856
        %v858 = vsel %vm570, %v824, 0.0
        %859 = vadd.xlane.f32.xlu0 %v858
        %v860 = vpop.xlane.xlu0 %859
        %v861 = vsel %vm570, %v825, 0.0
        %862 = vadd.xlane.f32.xlu0 %v861
        %v863 = vpop.xlane.xlu0 %862
        %v864 = vsel %vm570, %v826, 0.0
        %865 = vadd.xlane.f32.xlu0 %v864
        %v866 = vpop.xlane.xlu0 %865
        %v867 = vsel %vm570, %v827, 0.0
        %868 = vadd.xlane.f32.xlu0 %v867
        %v869 = vpop.xlane.xlu0 %868
        %v870 = vsel %vm570, %v828, 0.0
        %871 = vadd.xlane.f32.xlu0 %v870
        %v872 = vpop.xlane.xlu0 %871
        %v873 = vsel %vm570, %v829, 0.0
        %874 = vadd.xlane.f32.xlu0 %v873
        %v875 = vpop.xlane.xlu0 %874
        %v876 = vsel %vm570, %v830, 0.0
        %877 = vadd.xlane.f32.xlu0 %v876
        %v878 = vpop.xlane.xlu0 %877
        %v879 = vlaneseq
        %v880 = vshrl.u32 %v879, 7
        %882 = vset.pattern.permute.xlu0 %v880
        %883 = vperm.xlu0 %882, %v799
        %v884 = vpop.permute.xlu0 %883
        %v885 = vlaneseq
        %v886 = vshrl.u32 %v885, 7
        %v887 = vadd.s32 %v886, 8
        %888 = vset.pattern.permute.xlu0 %v887
        %889 = vperm.xlu0 %888, %v799
        %v890 = vpop.permute.xlu0 %889
        %v891 = vperm.slane %v569, 1
        %v892 = vlaneseq
        %v893 = vshrl.u32 %v892, 7
        %895 = vset.pattern.permute.xlu0 %v893
        %896 = vperm.xlu0 %895, %v891
        %v897 = vpop.permute.xlu0 %896
        %v898 = vlaneseq
        %v899 = vshrl.u32 %v898, 7
        %v900 = vadd.s32 %v899, 8
        %901 = vset.pattern.permute.xlu0 %v900
        %902 = vperm.xlu0 %901, %v891
        %v903 = vpop.permute.xlu0 %902
        %v904 = vperm.slane %v569, 2
        %v905 = vlaneseq
        %v906 = vshrl.u32 %v905, 7
        %908 = vset.pattern.permute.xlu0 %v906
        %909 = vperm.xlu0 %908, %v904
        %v910 = vpop.permute.xlu0 %909
        %v911 = vlaneseq
        %v912 = vshrl.u32 %v911, 7
        %v913 = vadd.s32 %v912, 8
        %914 = vset.pattern.permute.xlu0 %v913
        %915 = vperm.xlu0 %914, %v904
        %v916 = vpop.permute.xlu0 %915
        %v917 = vperm.slane %v569, 3
        %v918 = vlaneseq
        %v919 = vshrl.u32 %v918, 7
        %921 = vset.pattern.permute.xlu0 %v919
        %922 = vperm.xlu0 %921, %v917
        %v923 = vpop.permute.xlu0 %922
        %v924 = vlaneseq
        %v925 = vshrl.u32 %v924, 7
        %v926 = vadd.s32 %v925, 8
        %927 = vset.pattern.permute.xlu0 %v926
        %928 = vperm.xlu0 %927, %v917
        %v929 = vpop.permute.xlu0 %928
        %v930 = vperm.slane %v569, 4
        %v931 = vlaneseq
        %v932 = vshrl.u32 %v931, 7
        %934 = vset.pattern.permute.xlu0 %v932
        %935 = vperm.xlu0 %934, %v930
        %v936 = vpop.permute.xlu0 %935
        %v937 = vlaneseq
        %v938 = vshrl.u32 %v937, 7
        %v939 = vadd.s32 %v938, 8
        %940 = vset.pattern.permute.xlu0 %v939
        %941 = vperm.xlu0 %940, %v930
        %v942 = vpop.permute.xlu0 %941
        %v943 = vperm.slane %v569, 5
        %v944 = vlaneseq
        %v945 = vshrl.u32 %v944, 7
        %947 = vset.pattern.permute.xlu0 %v945
        %948 = vperm.xlu0 %947, %v943
        %v949 = vpop.permute.xlu0 %948
        %v950 = vlaneseq
        %v951 = vshrl.u32 %v950, 7
        %v952 = vadd.s32 %v951, 8
        %953 = vset.pattern.permute.xlu0 %v952
        %954 = vperm.xlu0 %953, %v943
        %v955 = vpop.permute.xlu0 %954
        %v956 = vperm.slane %v569, 6
        %v957 = vlaneseq
        %v958 = vshrl.u32 %v957, 7
        %960 = vset.pattern.permute.xlu0 %v958
        %961 = vperm.xlu0 %960, %v956
        %v962 = vpop.permute.xlu0 %961
        %v963 = vlaneseq
        %v964 = vshrl.u32 %v963, 7
        %v965 = vadd.s32 %v964, 8
        %966 = vset.pattern.permute.xlu0 %v965
        %967 = vperm.xlu0 %966, %v956
        %v968 = vpop.permute.xlu0 %967
        %v969 = vperm.slane %v569, 7
        %v970 = vlaneseq
        %v971 = vshrl.u32 %v970, 7
        %973 = vset.pattern.permute.xlu0 %v971
        %974 = vperm.xlu0 %973, %v969
        %v975 = vpop.permute.xlu0 %974
        %v976 = vlaneseq
        %v977 = vshrl.u32 %v976, 7
        %v978 = vadd.s32 %v977, 8
        %979 = vset.pattern.permute.xlu0 %v978
        %980 = vperm.xlu0 %979, %v969
        %v981 = vpop.permute.xlu0 %980
        %v998 = vmul.f32 %v833, %v884
        %v999 = vmul.f32 %v836, %v890
        %v1000 = vmul.f32 %v839, %v897
        %v1001 = vmul.f32 %v842, %v903
        %v1002 = vmul.f32 %v845, %v910
        %v1003 = vmul.f32 %v848, %v916
        %v1004 = vmul.f32 %v851, %v923
        %v1005 = vmul.f32 %v854, %v929
        %v1006 = vmul.f32 %v857, %v936
        %v1007 = vmul.f32 %v860, %v942
        %v1008 = vmul.f32 %v863, %v949
        %v1009 = vmul.f32 %v866, %v955
        %v1010 = vmul.f32 %v869, %v962
        %v1011 = vmul.f32 %v872, %v968
        %v1012 = vmul.f32 %v875, %v975
        %v1013 = vmul.f32 %v878, %v981
        %1030 = vset.pattern.permute.xlu0 0
        %1031 = vperm.xlu0 %1030, %v998
        %v1032 = vpop.permute.xlu0 %1031
        %1033 = vset.pattern.permute.xlu0 0
        %1034 = vperm.xlu0 %1033, %v999
        %v1035 = vpop.permute.xlu0 %1034
        %1036 = vset.pattern.permute.xlu0 0
        %1037 = vperm.xlu0 %1036, %v1000
        %v1038 = vpop.permute.xlu0 %1037
        %1039 = vset.pattern.permute.xlu0 0
        %1040 = vperm.xlu0 %1039, %v1001
        %v1041 = vpop.permute.xlu0 %1040
        %1042 = vset.pattern.permute.xlu0 0
        %1043 = vperm.xlu0 %1042, %v1002
        %v1044 = vpop.permute.xlu0 %1043
        %1045 = vset.pattern.permute.xlu0 0
        %1046 = vperm.xlu0 %1045, %v1003
        %v1047 = vpop.permute.xlu0 %1046
        %1048 = vset.pattern.permute.xlu0 0
        %1049 = vperm.xlu0 %1048, %v1004
        %v1050 = vpop.permute.xlu0 %1049
        %1051 = vset.pattern.permute.xlu0 0
        %1052 = vperm.xlu0 %1051, %v1005
        %v1053 = vpop.permute.xlu0 %1052
        %1054 = vset.pattern.permute.xlu0 0
        %1055 = vperm.xlu0 %1054, %v1006
        %v1056 = vpop.permute.xlu0 %1055
        %1057 = vset.pattern.permute.xlu0 0
        %1058 = vperm.xlu0 %1057, %v1007
        %v1059 = vpop.permute.xlu0 %1058
        %1060 = vset.pattern.permute.xlu0 0
        %1061 = vperm.xlu0 %1060, %v1008
        %v1062 = vpop.permute.xlu0 %1061
        %1063 = vset.pattern.permute.xlu0 0
        %1064 = vperm.xlu0 %1063, %v1009
        %v1065 = vpop.permute.xlu0 %1064
        %1066 = vset.pattern.permute.xlu0 0
        %1067 = vperm.xlu0 %1066, %v1010
        %v1068 = vpop.permute.xlu0 %1067
        %1069 = vset.pattern.permute.xlu0 0
        %1070 = vperm.xlu0 %1069, %v1011
        %v1071 = vpop.permute.xlu0 %1070
        %1072 = vset.pattern.permute.xlu0 0
        %1073 = vperm.xlu0 %1072, %v1012
        %v1074 = vpop.permute.xlu0 %1073
        %1075 = vset.pattern.permute.xlu0 0
        %1076 = vperm.xlu0 %1075, %v1013
        %v1077 = vpop.permute.xlu0 %1076
        %v1078 = vlaneseq
        %v1079 = vand.u32 %v1078, 127
        %v1080 = vperm.slane %v1032, %v1079
        %v1081 = vadd.s32 %v1079, 4294967288
        %v1082 = vperm.slane %v1035, %v1081
        %vm1083 = vcmask 130112
        %v1084 = vsel %vm1083, %v1082, %v1080
        %v1085 = vperm.slane %v1038, %v1079
        %v1086 = vperm.slane %v1041, %v1081
        %v1087 = vsel %vm1083, %v1086, %v1085
        %v1088 = vperm.slane %v1044, %v1079
        %v1089 = vperm.slane %v1047, %v1081
        %v1090 = vsel %vm1083, %v1089, %v1088
        %v1091 = vperm.slane %v1050, %v1079
        %v1092 = vperm.slane %v1053, %v1081
        %v1093 = vsel %vm1083, %v1092, %v1091
        %v1094 = vperm.slane %v1056, %v1079
        %v1095 = vperm.slane %v1059, %v1081
        %v1096 = vsel %vm1083, %v1095, %v1094
        %v1097 = vperm.slane %v1062, %v1079
        %v1098 = vperm.slane %v1065, %v1081
        %v1099 = vsel %vm1083, %v1098, %v1097
        %v1100 = vperm.slane %v1068, %v1079
        %v1101 = vperm.slane %v1071, %v1081
        %v1102 = vsel %vm1083, %v1101, %v1100
        %v1103 = vperm.slane %v1074, %v1079
        %v1104 = vperm.slane %v1077, %v1081
        %v1105 = vsel %vm1083, %v1104, %v1103
        %vm1106 = vcmask 1041409
        %v1107 = vsel %vm1106, %v1087, %v1084
        %vm1108 = vcmask 1042434
        %v1109 = vsel %vm1108, %v1090, %v1107
        %vm1110 = vcmask 1043459
        %v1111 = vsel %vm1110, %v1093, %v1109
        %vm1112 = vcmask 1044484
        %v1113 = vsel %vm1112, %v1096, %v1111
        %vm1114 = vcmask 1045509
        %v1115 = vsel %vm1114, %v1099, %v1113
        %vm1116 = vcmask 1046534
        %v1117 = vsel %vm1116, %v1102, %v1115
        %vm1118 = vcmask 1047559
        %v1119 = vsel %vm1118, %v1105, %v1117
        %v1121 = vsel %vm570, %v1119, 0.0
        %1122 = vadd.xlane.f32.xlu0 %v1121
        %v1123 = vpop.xlane.xlu0 %1122
        %v1124 = vsub.f32 %v573, 1.0
        %v1125 = vmul.f32 %v1124, %v573
        %v1126 = vsub.f32 %v1123, %v573
        %v1127 = vadd.f32 %v1125, 0.0001
        %v1128 = vrcp.pop %v1127
        %v1129 = vmul.f32 %v1127, %v1128
        %v1130 = vsub.f32 1.0, %v1129
        %v1131 = vmul.f32 %v1128, %v1130
        %v1132 = vadd.f32 %v1128, %v1131
        %vm1133 = vweird.f32 %v1127
        %vm1134 = vweird.f32 %v1128
        %vm1135 = vmor %vm1133, %vm1134
        %v1136 = vsel %vm1135, %v1128, %v1132
        %v1137 = vand.u32 2147483647, %v1127
        %vm1138 = vcmp.eq.f32.partialorder %v1137, 8.507059e+37
        %v1139 = vand.u32 %v1127, 2147483648
        %v1140 = vor.u32 1.1754944e-38, %v1139
        %v1141 = vsel %vm1138, %v1140, %v1136
        %v1142 = vmul.f32 %v1126, %v1141
        %vm1143 = vcmp.eq.f32.partialorder %v565, 1.0
        %v1144 = vsel %vm1143, 1, 0
        %v1145 = vcvt.s32.f32 %v1144
        %vm1146 = vcmp.lt.f32.partialorder %v565, 1.0
        %v1147 = vsel %vm1146, 1, 0
        %v1148 = vcvt.s32.f32 %v1147
        %v1149 = vsel %vm570, %v1145, 0.0
        %1150 = vadd.xlane.f32.xlu0 %v1149
        %v1151 = vpop.xlane.xlu0 %1150
        %v1152 = vlog2.pop %v542
        %v1153 = vmul.f32 %v1152, 0.6931472
        %v1154 = vmul.f32 %v1145, %v1153
        %v1155 = vsub.f32 1.0, %v542
        %v1156 = vmul.f32 %v1155, %v1155
        %v1157 = vmul.f32 %v1154, %v1156
        %v1158 = vsel %vm570, %v1157, 0.0
        %1159 = vadd.xlane.f32.xlu0 %v1158
        %v1160 = vpop.xlane.xlu0 %1159
        %v1161 = vlog2.pop %v1155
        %v1162 = vmul.f32 %v1161, 0.6931472
        %v1163 = vmul.f32 %v1148, %v1162
        %v1164 = vmul.f32 %v1163, %v542
        %v1165 = vmul.f32 %v1164, %v542
        %v1166 = vsel %vm570, %v1165, 0.0
        %1167 = vadd.xlane.f32.xlu0 %v1166
        %v1168 = vpop.xlane.xlu0 %1167
        %v1169 = vsub.f32 1.0, %v565
        %v1170 = vmul.f32 %v1169, %v1169
        %v1171 = vmul.f32 %v1170, %v1170
        %v1172 = vsel %vm570, %v1171, 0.0
        %1173 = vadd.xlane.f32.xlu0 %v1172
        %v1174 = vpop.xlane.xlu0 %1173
        %v1175 = vmul.f32 %v1168, %v1174
        %vm1176 = vcmp.eq.f32.partialorder %v1151, 0.0
        %v1177 = vsel %vm1176, 1.0, %v1151
        %v1178 = vsub.f32 0.0, %v1175
        %v1179 = vadd.f32 %v1160, %v1175
        %v1180 = vsub.f32 0.0, %v1179
        %v1181 = vrcp.pop %v1177
        %v1182 = vmul.f32 %v1177, %v1181
        %v1183 = vsub.f32 1.0, %v1182
        %v1184 = vmul.f32 %v1181, %v1183
        %v1185 = vadd.f32 %v1181, %v1184
        %vm1186 = vweird.f32 %v1177
        %vm1187 = vweird.f32 %v1181
        %vm1188 = vmor %vm1186, %vm1187
        %v1189 = vsel %vm1188, %v1181, %v1185
        %v1190 = vand.u32 2147483647, %v1177
        %vm1191 = vcmp.eq.f32.partialorder %v1190, 8.507059e+37
        %v1192 = vand.u32 %v1177, 2147483648
        %v1193 = vor.u32 1.1754944e-38, %v1192
        %v1194 = vsel %vm1191, %v1193, %v1189
        %v1195 = vmul.f32 %v1180, %v1194
        %v1196 = vsel %vm1176, %v1178, %v1195
        %vm1197 = vcmask 7168
        %v1198 = vsel %vm1197, %v1196, 0.0
        %1199 = vadd.xlane.f32.xlu0 %v1198
        %v1200 = vpop.xlane.xlu0 %1199
        %v1201 = vrot.slane %v1200, 4
        %v1202 = vadd.f32 %v1200, %v1201
        %v1203 = vrot.slane %v1202, 2
        %v1204 = vadd.f32 %v1202, %v1203
        %v1205 = vrot.slane %v1204, 1
        %v1206 = vadd.f32 %v1204, %v1205
        %s1207 = vtos %v1206
        %vm1208 = vcmp.eq.f32.partialorder %v566, 1.0
        %v1209 = vsel %vm1208, 1, 0
        %v1210 = vcvt.s32.f32 %v1209
        %vm1211 = vcmp.lt.f32.partialorder %v566, 1.0
        %v1212 = vsel %vm1211, 1, 0
        %v1213 = vcvt.s32.f32 %v1212
        %v1214 = vsel %vm570, %v1210, 0.0
        %1215 = vadd.xlane.f32.xlu0 %v1214
        %v1216 = vpop.xlane.xlu0 %1215
        %v1217 = vlog2.pop %v564
        %v1218 = vmul.f32 %v1217, 0.6931472
        %v1219 = vmul.f32 %v1210, %v1218
        %v1220 = vsub.f32 1.0, %v564
        %v1221 = vmul.f32 %v1220, %v1220
        %v1222 = vmul.f32 %v1219, %v1221
        %v1223 = vsel %vm570, %v1222, 0.0
        %1224 = vadd.xlane.f32.xlu0 %v1223
        %v1225 = vpop.xlane.xlu0 %1224
        %v1226 = vlog2.pop %v1220
        %v1227 = vmul.f32 %v1226, 0.6931472
        %v1228 = vmul.f32 %v1213, %v1227
        %v1229 = vmul.f32 %v1228, %v564
        %v1230 = vmul.f32 %v1229, %v564
        %v1231 = vsel %vm570, %v1230, 0.0
        %1232 = vadd.xlane.f32.xlu0 %v1231
        %v1233 = vpop.xlane.xlu0 %1232
        %v1234 = vsub.f32 1.0, %v566
        %v1235 = vmul.f32 %v1234, %v1234
        %v1236 = vmul.f32 %v1235, %v1235
        %v1237 = vsel %vm570, %v1236, 0.0
        %1238 = vadd.xlane.f32.xlu0 %v1237
        %v1239 = vpop.xlane.xlu0 %1238
        %v1240 = vmul.f32 %v1233, %v1239
        %vm1241 = vcmp.eq.f32.partialorder %v1216, 0.0
        %v1242 = vsel %vm1241, 1.0, %v1216
        %v1243 = vsub.f32 0.0, %v1240
        %v1244 = vadd.f32 %v1225, %v1240
        %v1245 = vsub.f32 0.0, %v1244
        %v1246 = vrcp.pop %v1242
        %v1247 = vmul.f32 %v1242, %v1246
        %v1248 = vsub.f32 1.0, %v1247
        %v1249 = vmul.f32 %v1246, %v1248
        %v1250 = vadd.f32 %v1246, %v1249
        %vm1251 = vweird.f32 %v1242
        %vm1252 = vweird.f32 %v1246
        %vm1253 = vmor %vm1251, %vm1252
        %v1254 = vsel %vm1253, %v1246, %v1250
        %v1255 = vand.u32 2147483647, %v1242
        %vm1256 = vcmp.eq.f32.partialorder %v1255, 8.507059e+37
        %v1257 = vand.u32 %v1242, 2147483648
        %v1258 = vor.u32 1.1754944e-38, %v1257
        %v1259 = vsel %vm1256, %v1258, %v1254
        %v1260 = vmul.f32 %v1245, %v1259
        %v1261 = vsel %vm1241, %v1243, %v1260
        %v1262 = vsel %vm1197, %v1261, 0.0
        %1263 = vadd.xlane.f32.xlu0 %v1262
        %v1264 = vpop.xlane.xlu0 %1263
        %v1265 = vrot.slane %v1264, 4
        %v1266 = vadd.f32 %v1264, %v1265
        %v1267 = vrot.slane %v1266, 2
        %v1268 = vadd.f32 %v1266, %v1267
        %v1269 = vrot.slane %v1268, 1
        %v1270 = vadd.f32 %v1268, %v1269
        %s1271 = vtos %v1270
        %s1272 = sadd.f32 %s1207, %s1271
        %v1273 = vsub.f32 %v567, %v565
        %v1274 = vand.u32 2147483647, %v1273
        %vm1275 = vcmp.lt.f32.partialorder %v1274, 1.0
        %v1276 = vmul.f32 %v1273, 0.5
        %v1277 = vmul.f32 %v1276, %v1273
        %v1278 = vsub.f32 %v1274, 0.5
        %v1279 = vsel %vm1275, %v1277, %v1278
        %v1280 = vmul.f32 %v1279, %v569
        %v1281 = vsel %vm570, %v1280, 0.0
        %1282 = vadd.xlane.f32.xlu0 %v1281
        %v1283 = vpop.xlane.xlu0 %1282
        %v1284 = vrot.slane %v1283, 4
        %v1285 = vadd.f32 %v1283, %v1284
        %v1286 = vrot.slane %v1285, 2
        %v1287 = vadd.f32 %v1285, %v1286
        %v1288 = vrot.slane %v1287, 1
        %v1289 = vadd.f32 %v1287, %v1288
        %s1290 = vtos %v1289
        %v1291 = vsub.f32 %v568, %v566
        %v1292 = vand.u32 2147483647, %v1291
        %vm1293 = vcmp.lt.f32.partialorder %v1292, 1.0
        %v1294 = vmul.f32 %v1291, 0.5
        %v1295 = vmul.f32 %v1294, %v1291
        %v1296 = vsub.f32 %v1292, 0.5
        %v1297 = vsel %vm1293, %v1295, %v1296
        %v1298 = vmul.f32 %v1297, %v569
        %v1299 = vsel %vm570, %v1298, 0.0
        %1300 = vadd.xlane.f32.xlu0 %v1299
        %v1301 = vpop.xlane.xlu0 %1300
        %v1302 = vrot.slane %v1301, 4
        %v1303 = vadd.f32 %v1301, %v1302
        %v1304 = vrot.slane %v1303, 2
        %v1305 = vadd.f32 %v1303, %v1304
        %v1306 = vrot.slane %v1305, 1
        %v1307 = vadd.f32 %v1305, %v1306
        %s1308 = vtos %v1307
        %s1309 = sadd.f32 %s1290, %s1308
        %v1310 = vrot.slane %v573, 4
        %v1311 = vadd.f32 %v573, %v1310
        %v1312 = vrot.slane %v1311, 2
        %v1313 = vadd.f32 %v1311, %v1312
        %v1314 = vrot.slane %v1313, 1
        %v1315 = vadd.f32 %v1313, %v1314
        %s1316 = vtos %v1315
        %v1317 = vsel %vm1197, %v596, 0.0
        %1318 = vadd.xlane.f32.xlu0 %v1317
        %v1319 = vpop.xlane.xlu0 %1318
        %v1320 = vrot.slane %v1319, 4
        %v1321 = vadd.f32 %v1319, %v1320
        %v1322 = vrot.slane %v1321, 2
        %v1323 = vadd.f32 %v1321, %v1322
        %v1324 = vrot.slane %v1323, 1
        %v1325 = vadd.f32 %v1323, %v1324
        %s1326 = vtos %v1325
        %v1327 = vsel %vm1197, %v1142, 0.0
        %1328 = vadd.xlane.f32.xlu0 %v1327
        %v1329 = vpop.xlane.xlu0 %1328
        %v1330 = vrot.slane %v1329, 4
        %v1331 = vadd.f32 %v1329, %v1330
        %v1332 = vrot.slane %v1331, 2
        %v1333 = vadd.f32 %v1331, %v1332
        %v1334 = vrot.slane %v1333, 1
        %v1335 = vadd.f32 %v1333, %v1334
        %s1336 = vtos %v1335
        %s1337 = sadd.f32 %s1326, %s1336
        %v1338 = vlaneseq
        %v1339 = vshrl.u32 %v1338, 7
        %vm1340 = vcmp.eq.s32.totalorder %v1339, 0
        %vm1341 = vcmp.eq.s32.totalorder %v1079, 0
        %vm1342 = vmand %vm1340, %vm1341
        %v1343 = vstv %s1272
        %v1344 = vsel %vm1342, %v1343, 0.0
        %vm1345 = vcmp.eq.s32.totalorder %v1079, 1
        %vm1346 = vmand %vm1340, %vm1345
        %v1347 = vstv %s1309
        %v1348 = vsel %vm1346, %v1347, 0.0
        %v1349 = vadd.f32 %v1344, %v1348
        %vm1350 = vcmp.eq.s32.totalorder %v1079, 2
        %vm1351 = vmand %vm1340, %vm1350
        %v1352 = vstv %s1316
        %v1353 = vsel %vm1351, %v1352, 0.0
        %v1354 = vadd.f32 %v1349, %v1353
        %vm1355 = vcmp.eq.s32.totalorder %v1079, 3
        %vm1356 = vmand %vm1340, %vm1355
        %v1357 = vstv %s1337
        %v1358 = vsel %vm1356, %v1357, 0.0
        %v1359 = vadd.f32 %v1354, %v1358
        %1360 = vst [vmem:[%s520] sm:$0xff] %v1359
        %s1361 = sand.u32 %s223, 1
        %s1362 = scalar_lea.sflag [#allocation4], %s1361
        %s1363 = sand.u32 %s223, 1
        %s1364 = smul.addr %s1363, 8
        %s1365 = scalar_lea.vmem [#allocation14], %s1364
        // Predicated region
        $region77: #{tpu_custom_call.1} parent=47 // pred_check
          %p1366 = pneg %p233
        $region78: #{tpu_custom_call.1} parent=47 // pred_check_branch
          %1368 = sbr.rel (%p1366) target = $region80
        $region79: #{tpu_custom_call.1} parent=47 // pred_region
          %1370 = vsyncadd %s1362, 0
          %s1371 = smul.addr %s33, 8
          %s1372 = scalar_lea.hbm %s7, %s1371
          %s1374 = sshll.u32 %s1365, 4
          %s1375 = int_to_ptr.vmem [resolvable:$true] %s1374
          %s1376 = sshll.u32 %s1372, 4
          %s1377 = int_to_ptr.hbm [resolvable:$true] %s1376
          %1379 = dma.vmem_to_hbm [thread:$0]  %s1375, 128, %s1377, %s1362
        $region80: #{tpu_custom_call.1} parent=47 // pred_fallthru
          _
      $region48: #{tpu_custom_call.1} parent=5 // pred_fallthru
        _
      %p1380 = scmp.le.s32.totalorder 2, %s28
      // Predicated region
      $region81: #{tpu_custom_call.1} parent=5 // pred_check
        %p1381 = pneg %p1380
      $region82: #{tpu_custom_call.1} parent=5 // pred_check_branch
        %1383 = sbr.rel (%p1381) target = $region84
      $region83: #{tpu_custom_call.1} parent=5 // pred_region
        %s1384 = ssub.s32 %s28, 2
        // Predicated region
        $region85: #{tpu_custom_call.1} parent=83 // pred_check
          %p1385 = pneg %p239
        $region86: #{tpu_custom_call.1} parent=83 // pred_check_branch
          %1387 = sbr.rel (%p1385) target = $region88
        $region87: #{tpu_custom_call.1} parent=83 // pred_region
          %s1388 = sand.u32 %s224, 1
          %s1389 = scalar_lea.sflag [#allocation4], %s1388
          %s1390 = sand.u32 %s224, 1
          %s1391 = smul.addr %s1390, 8
          %s1392 = scalar_lea.vmem [#allocation14], %s1391
          %1394 = dma.done %s1389, 128
        $region88: #{tpu_custom_call.1} parent=83 // pred_fallthru
          _
      $region84: #{tpu_custom_call.1} parent=5 // pred_fallthru
        _
    $region6: #{tpu_custom_call.1} parent=1 // loop_footer
      %s32 = sadd.s32 1, %s28
    $region7: #{tpu_custom_call.1} parent=1 // loop_footer_branch
      %27 = sbr.rel target = $region3
    $region8: #{tpu_custom_call.1} parent=1 // loop_exit
      _
    %1395 = vsyncpa [#allocation3], 1
    %s1396 = scalar_lea.sflag [#allocation3], 1
    %1397 = vsyncpa %s1396, 1
    %1398 = vsyncpa [#allocation6], 1
    %s1399 = scalar_lea.sflag [#allocation6], 1
    %1400 = vsyncpa %s1399, 1
    %1401 = vsyncpa [#allocation9], 1
    %s1402 = scalar_lea.sflag [#allocation9], 1
    %1403 = vsyncpa %s1402, 1
    %1404 = vsyncpa [#allocation12], 1
    %s1405 = scalar_lea.sflag [#allocation12], 1
    %1406 = vsyncpa %s1405, 1
    %1407 = vsyncpa [#allocation4], 1
    %s1408 = scalar_lea.sflag [#allocation4], 1
    %1409 = vsyncpa %s1408, 1

</llo_original>
